<compile_context>
chip_gen: v5e
topology: v5e:2x2
jax: 0.10.0
libtpu: 0.0.40
codegen_flags: <defaults>
</compile_context>

<pallas_src>
import jax
import jax.numpy as jnp
from jax.experimental import pallas as pl
from jax.experimental.pallas import tpu as pltpu


def _scale_mul_kernel(scale_ref, x_ref, o_ref):
    # scale_ref: (TILE_C, 1); x_ref / o_ref: (TILE_C, TILE_HW)
    o_ref[...] = x_ref[...] * scale_ref[...]


def _round_up(x, m):
    return ((x + m - 1) // m) * m


def _round_down(x, m):
    return (x // m) * m


def _num_tensorcores():
    """Best-effort TensorCores-per-device (v7x: 2; v5e/v6e: 1)."""
    try:
        info = pltpu.get_tpu_info()
        for attr in ("num_cores", "num_tensorcores", "tensorcore_count", "core_count"):
            v = getattr(info, attr, None)
            if isinstance(v, int) and v > 0:
                return v
    except Exception:
        pass
    try:
        kind = jax.devices()[0].device_kind.lower()
        if ("v7" in kind) or ("v4" in kind) or ("v5p" in kind):
            return 2
    except Exception:
        pass
    return 1


def channel_scale_mul(scale, x, *, target_block_bytes=2 << 20):
    """Broadcast multiply: (1,C,1,1) * (1,C,H,W) -> (1,C,H,W)."""
    n, c, h, w = x.shape
    assert n == 1 and scale.shape == (1, c, 1, 1)
    hw = h * w
    itemsize = jnp.dtype(x.dtype).itemsize
    # dtype-aware sublane packing unit (second-to-last dim): f32->8, bf16->16, i8/fp8->32
    sublane = {4: 8, 2: 16, 1: 32}.get(itemsize, 8)
    bytes_per_row = hw * itemsize

    # Contiguous reshapes: bitcasts in XLA, no extra HBM passes.
    x2d = x.reshape(c, hw)
    s2d = scale.reshape(c, 1)

    # ---- tile selection ----------------------------------------------------
    if bytes_per_row > target_block_bytes:
        # Very large spatial extent: tile the lane (HW) axis too (multiple of 128).
        tile_c = c if c < sublane else sublane
        tile_hw = max(128, _round_down(target_block_bytes // (tile_c * itemsize), 128))
    else:
        tile_hw = hw  # full spatial row == array dim -> no 128 constraint
        max_rows = max(1, target_block_bytes // bytes_per_row)
        n_blocks = pl.cdiv(c, max_rows)
        cores = _num_tensorcores()
        if cores > 1 and c >= cores * sublane:
            # Even split across TensorCores (v7x) so no core idles on a tail block.
            n_blocks = _round_up(max(n_blocks, cores), cores)
        if n_blocks <= 1:
            tile_c = c    # single full-channel block (== array dim)
        else:
            tile_c = _round_up(pl.cdiv(c, n_blocks), sublane)

    grid = (pl.cdiv(c, tile_c), pl.cdiv(hw, tile_hw))

    cost = pl.CostEstimate(
        flops=c * hw,
        transcendentals=0,
        bytes_accessed=2 * c * hw * itemsize + c * itemsize,
    )

    out2d = pl.pallas_call(
        _scale_mul_kernel,
        out_shape=jax.ShapeDtypeStruct((c, hw), x.dtype),
        grid_spec=pltpu.PrefetchScalarGridSpec(
            num_scalar_prefetch=0,
            grid=grid,
            in_specs=[
                pl.BlockSpec((tile_c, 1), lambda ci, hi: (ci, 0)),
                pl.BlockSpec((tile_c, tile_hw), lambda ci, hi: (ci, hi)),
            ],
            out_specs=pl.BlockSpec((tile_c, tile_hw), lambda ci, hi: (ci, hi)),
        ),
        compiler_params=pltpu.CompilerParams(
            dimension_semantics=("parallel", "parallel"),
        ),
        cost_estimate=cost,
    )(s2d, x2d)

    return out2d.reshape(n, c, h, w)


if __name__ == "__main__":
    key = jax.random.PRNGKey(0)
    k1, k2 = jax.random.split(key)

    # Shapes from the module spec: x271:(1,2904,14,14), x276:(1,2904,1,1)
    C, H, W = 2904, 14, 14
    x271 = jax.random.normal(k1, (1, C, H, W), dtype=jnp.float32)
    x276 = jax.random.normal(k2, (1, C, 1, 1), dtype=jnp.float32)

    fn = jax.jit(channel_scale_mul)
    out = jax.block_until_ready(fn(x276, x271))
    ref = x276 * x271
    assert out.shape == ref.shape
    assert jnp.allclose(out, ref, atol=1e-6, rtol=1e-6)

    # Small bf16 case: exercises dtype-aware sublane rounding + ragged channel tail.
    xs = jax.random.normal(k1, (1, 40, 7, 7), dtype=jnp.bfloat16)
    ss = jax.random.normal(k2, (1, 40, 1, 1), dtype=jnp.bfloat16)
    out2 = jax.block_until_ready(jax.jit(channel_scale_mul)(ss, xs))
    ref2 = ss * xs
    assert jnp.allclose(out2.astype(jnp.float32), ref2.astype(jnp.float32),
                        atol=2e-2, rtol=2e-2)

    print("KERNEL_OK")
</pallas_src>

<mosaic_0001>
module attributes {stable_mosaic.version = 11 : i64} {
  func.func @_scale_mul_kernel(%arg0: i32, %arg1: i32, %arg2: memref<1456x1xf32, #tpu.memory_space<vmem>>, %arg3: memref<1456x196xf32, #tpu.memory_space<vmem>>, %arg4: memref<1456x196xf32, #tpu.memory_space<vmem>>) attributes {dimension_semantics = [#tpu.dimension_semantics<parallel>, #tpu.dimension_semantics<parallel>], iteration_bounds = array<i64: 2, 1>, scalar_prefetch = 0 : i64, scratch_operands = 0 : i64, tpu.core_type = #tpu.core_type<tc>, window_params = [{transform_indices = @transform_0, window_bounds = array<i64: 1456, 1>}, {transform_indices = @transform_1, window_bounds = array<i64: 1456, 196>}, {transform_indices = @transform_2, window_bounds = array<i64: 1456, 196>}]} {
    %c0 = arith.constant 0 : index
    %c0_0 = arith.constant 0 : index
    %0 = vector.load %arg3[%c0, %c0_0] : memref<1456x196xf32, #tpu.memory_space<vmem>>, vector<1456x196xf32>
    %c0_1 = arith.constant 0 : index
    %c0_2 = arith.constant 0 : index
    %1 = vector.load %arg2[%c0_1, %c0_2] : memref<1456x1xf32, #tpu.memory_space<vmem>>, vector<1456x1xf32>
    %2 = vector.broadcast %1 : vector<1456x1xf32> to vector<1456x196xf32>
    %3 = arith.mulf %0, %2 : vector<1456x196xf32>
    %c0_3 = arith.constant 0 : index
    %c0_4 = arith.constant 0 : index
    %4 = vector.load %arg4[%c0_3, %c0_4] : memref<1456x196xf32, #tpu.memory_space<vmem>>, vector<1456x196xf32>
    tpu.vector_store %arg4[%c0_3, %c0_4], %3 {strides = array<i32>} : memref<1456x196xf32, #tpu.memory_space<vmem>>, vector<1456x196xf32>,
    return
  }
  func.func @transform_0(%arg0: i32, %arg1: i32) -> (i32, i32) {
    %c0_i32 = arith.constant 0 : i32
    %c0_i32_0 = arith.constant 0 : i32
    return %arg0, %c0_i32 : i32, i32
  }
  func.func @transform_1(%arg0: i32, %arg1: i32) -> (i32, i32) {
    %c0_i32 = arith.constant 0 : i32
    return %arg0, %arg1 : i32, i32
  }
  func.func @transform_2(%arg0: i32, %arg1: i32) -> (i32, i32) {
    %c0_i32 = arith.constant 0 : i32
    return %arg0, %arg1 : i32, i32
  }
}

</mosaic_0001>

<llo_original>
// kernel: channel_scale_mul.1
$region0: #{channel_scale_mul.1}
  #allocation0 [shape = 'u32[]', space=smem, size = 0x4, offset = 0x4, fixed_abs, tag = 'smem constant byte address 0x4 - core index']
  #allocation1 [shape = 'u32[72,128]{1,0:T(1,128)}', space=vmem, size = 0x9000, scoped, tag = 'internal scratch']
  %s0 = inlined_call_operand.vmem [shape: f32[2904,1], index: 0, kind: input, shape index: {}]
  %s1 = inlined_call_operand.vmem [shape: f32[2904,196], index: 1, kind: input, shape index: {}]
  %s2 = inlined_call_operand.vmem [shape: f32[2904,196], index: 2, kind: output, shape index: {}]
  %s3 = sld [smem:[#allocation0]]
  $region67: #{channel_scale_mul.1} parent=0
    _
  %s5 = ssub.s32 1, %s3
  %s6 = scalar_select 0, %s5, %s3
  $region1: #{channel_scale_mul.1} parent=0
    #allocation2 [shape = 'u8[2981888]{0}', space=vmem, size = 0x2d8000, scoped, tag = 'output window, operand 0']
    loop: start=0, step=1, limit=4
    $region2: #{channel_scale_mul.1} parent=1 // loop_pre_header
      _
    $region3: #{channel_scale_mul.1} parent=1 // loop_header
      %s8 = sphi 0, %s12
      %p9 = scmp.ge.s32.totalorder %s8, 4
      %s15 = sphi 0, %s27
      %s16 = sphi 0, %s23
      %s17 = sphi 0, %s15
      %s18 = sphi 0, %s16
      %s19 = sphi 0, %s17
      %s20 = sphi 0, %s18
      %s30 = sphi 0, %s32
      %s33 = sphi 0, %s30
      %s34 = sphi 0, %s33
      %s50 = sphi 0, %s34
      %s58 = sphi 0, %s60
      %s61 = sphi 0, %s58
      %s62 = sphi 0, %s61
      %s78 = sphi 0, %s62
      %s86 = sphi 0, %s88
      %s89 = sphi 0, %s86
      %s90 = sphi 0, %s89
      %s106 = sphi 0, %s90
    $region4: #{channel_scale_mul.1} parent=1 // loop_header_branch
      %11 = sbr.rel (%p9) target = $region8
    $region5: #{channel_scale_mul.1} parent=1 // loop_body
      %s13 = ssub.s32 %s8, 1
      %s14 = ssub.s32 %s8, 2
      %s21 = sadd.s32 1, %s16
      %p22 = scmp.ge.s32.totalorder %s21, 1
      %s23 = scalar_select %p22, 0, %s21
      %s24 = sadd.s32 1, %s15
      %s25 = scalar_select %p22, %s24, %s15
      %p26 = scmp.ge.s32.totalorder %s25, 2
      %s27 = scalar_select %p26, 0, %s25
      %s28 = ssub.s32 %s15, %s27
      %p29 = scmp.eq.s32.totalorder %s28, 0
      %s31 = sadd.s32 %s30, 1
      %s32 = scalar_select %p29, %s30, %s31
      %p35 = pneg %p29
      %p36 = scmp.eq.s32.totalorder %s8, 1
      %p37 = por %p35, %p36
      %p38 = scmp.ne.s32.totalorder %s30, %s33
      %p39 = scmp.eq.s32.totalorder %s8, 0
      %p40 = por %p38, %p39
      %p41 = scmp.ne.s32.totalorder %s30, %s33
      %p42 = scmp.eq.s32.totalorder %s13, 1
      %p43 = por %p41, %p42
      %p44 = scmp.ne.s32.totalorder %s33, %s34
      %p45 = scmp.eq.s32.totalorder %s13, 0
      %p46 = por %p44, %p45
      %p47 = scmp.ne.s32.totalorder %s33, %s34
      %p48 = scmp.eq.s32.totalorder %s14, 1
      %p49 = por %p47, %p48
      %p51 = scmp.ne.s32.totalorder %s34, %s50
      %p52 = scmp.eq.s32.totalorder %s14, 0
      %p53 = por %p51, %p52
      %s54 = ssub.s32 %s15, %s27
      %s55 = ssub.s32 %s16, %s23
      %s56 = sor.u32 %s54, %s55
      %p57 = scmp.eq.s32.totalorder %s56, 0
      %s59 = sadd.s32 %s58, 1
      %s60 = scalar_select %p57, %s58, %s59
      %p63 = pneg %p57
      %p64 = scmp.eq.s32.totalorder %s8, 1
      %p65 = por %p63, %p64
      %p66 = scmp.ne.s32.totalorder %s58, %s61
      %p67 = scmp.eq.s32.totalorder %s8, 0
      %p68 = por %p66, %p67
      %p69 = scmp.ne.s32.totalorder %s58, %s61
      %p70 = scmp.eq.s32.totalorder %s13, 1
      %p71 = por %p69, %p70
      %p72 = scmp.ne.s32.totalorder %s61, %s62
      %p73 = scmp.eq.s32.totalorder %s13, 0
      %p74 = por %p72, %p73
      %p75 = scmp.ne.s32.totalorder %s61, %s62
      %p76 = scmp.eq.s32.totalorder %s14, 1
      %p77 = por %p75, %p76
      %p79 = scmp.ne.s32.totalorder %s62, %s78
      %p80 = scmp.eq.s32.totalorder %s14, 0
      %p81 = por %p79, %p80
      %s82 = ssub.s32 %s15, %s27
      %s83 = ssub.s32 %s16, %s23
      %s84 = sor.u32 %s82, %s83
      %p85 = scmp.eq.s32.totalorder %s84, 0
      %s87 = sadd.s32 %s86, 1
      %s88 = scalar_select %p85, %s86, %s87
      %p91 = pneg %p85
      %p92 = scmp.eq.s32.totalorder %s8, 1
      %p93 = por %p91, %p92
      %p94 = scmp.ne.s32.totalorder %s86, %s89
      %p95 = scmp.eq.s32.totalorder %s8, 0
      %p96 = por %p94, %p95
      %p97 = scmp.ne.s32.totalorder %s86, %s89
      %p98 = scmp.eq.s32.totalorder %s13, 1
      %p99 = por %p97, %p98
      %p100 = scmp.ne.s32.totalorder %s89, %s90
      %p101 = scmp.eq.s32.totalorder %s13, 0
      %p102 = por %p100, %p101
      %p103 = scmp.ne.s32.totalorder %s89, %s90
      %p104 = scmp.eq.s32.totalorder %s14, 1
      %p105 = por %p103, %p104
      %p107 = scmp.ne.s32.totalorder %s90, %s106
      %p108 = scmp.eq.s32.totalorder %s14, 0
      %p109 = por %p107, %p108
      %p110 = scmp.le.s32.totalorder 1, %s8
      %p111 = scmp.lt.s32.totalorder %s8, 3
      %p112 = pnand %p110, %p111
      %p113 = pneg %p112
      // Predicated region
      $region9: #{channel_scale_mul.1} parent=5 // pred_check
        _
      $region10: #{channel_scale_mul.1} parent=5 // pred_check_branch
        %115 = sbr.rel (%p112) target = $region12
      $region11: #{channel_scale_mul.1} parent=5 // pred_region
        %s116 = ssub.s32 %s8, 1
      $region12: #{channel_scale_mul.1} parent=5 // pred_fallthru
        _
      %p117 = scmp.lt.s32.totalorder %s8, 2
      // Predicated region
      $region13: #{channel_scale_mul.1} parent=5 // pred_check
        %p118 = pneg %p117
      $region14: #{channel_scale_mul.1} parent=5 // pred_check_branch
        %120 = sbr.rel (%p118) target = $region16
      $region15: #{channel_scale_mul.1} parent=5 // pred_region
        // Predicated region
        $region17: #{channel_scale_mul.1} parent=15 // pred_check
          %p121 = pneg %p40
        $region18: #{channel_scale_mul.1} parent=15 // pred_check_branch
          %123 = sbr.rel (%p121) target = $region20
        $region19: #{channel_scale_mul.1} parent=15 // pred_region
          %s124 = smul.u32 182, %s15
          %s125 = ssub.s32 363, %s124
          %p126 = scmp.lt.s32.totalorder %s125, 182
          %s127 = scalar_select %p126, %s125, 182
          %s128 = smul.u32 8, %s127
          %p129 = scmp.lt.s32.totalorder %s124, 362
          %s130 = scalar_select %p129, %s124, 362
          %s131 = smul.addr %s130, 8
          %s132 = scalar_lea.vmem %s0, %s131
          %s133 = smul.u32 182, %s15
          %s134 = ssub.s32 363, %s133
          %p135 = scmp.lt.s32.totalorder %s134, 182
          %s136 = scalar_select %p135, %s134, 182
          %s137 = smul.u32 8, %s136
        $region20: #{channel_scale_mul.1} parent=15 // pred_fallthru
          _
        // Predicated region
        $region21: #{channel_scale_mul.1} parent=15 // pred_check
          %p138 = pneg %p68
        $region22: #{channel_scale_mul.1} parent=15 // pred_check_branch
          %140 = sbr.rel (%p138) target = $region24
        $region23: #{channel_scale_mul.1} parent=15 // pred_region
          %s141 = smul.u32 182, %s15
          %s142 = smul.u32 2, %s16
          %s143 = ssub.s32 363, %s141
          %p144 = scmp.lt.s32.totalorder %s143, 182
          %s145 = scalar_select %p144, %s143, 182
          %s146 = smul.u32 8, %s145
          %s147 = smul.u32 %s146, 2
          %p148 = scmp.lt.s32.totalorder %s141, 362
          %s149 = scalar_select %p148, %s141, 362
          %p150 = scmp.lt.s32.totalorder %s142, 1
          %s151 = scalar_select %p150, %s142, 1
          %s152 = smul.addr %s149, 2
          %s153 = sadd.s32 %s151, %s152
          %s154 = smul.addr %s153, 8
          %s155 = scalar_lea.vmem %s1, %s154
          %s156 = smul.u32 182, %s15
          %s157 = smul.u32 2, %s16
          %s158 = ssub.s32 363, %s156
          %p159 = scmp.lt.s32.totalorder %s158, 182
          %s160 = scalar_select %p159, %s158, 182
          %s161 = smul.u32 8, %s160
          %s162 = smul.u32 %s161, 2
        $region24: #{channel_scale_mul.1} parent=15 // pred_fallthru
          _
      $region16: #{channel_scale_mul.1} parent=5 // pred_fallthru
        _
      %p163 = scmp.le.s32.totalorder 1, %s8
      %p164 = scmp.lt.s32.totalorder %s8, 3
      %p165 = pnand %p163, %p164
      %p166 = pneg %p165
      // Predicated region
      $region25: #{channel_scale_mul.1} parent=5 // pred_check
        _
      $region26: #{channel_scale_mul.1} parent=5 // pred_check_branch
        %168 = sbr.rel (%p165) target = $region28
      $region27: #{channel_scale_mul.1} parent=5 // pred_region
        %s169 = ssub.s32 %s8, 1
        %s170 = smul.u32 182, %s17
        %s171 = ssub.s32 363, %s170
        %p172 = scmp.lt.s32.totalorder %s171, 182
        %s173 = scalar_select %p172, %s171, 182
        %s174 = smul.u32 8, %s173
        %p175 = scmp.lt.s32.totalorder %s170, 362
        %s176 = scalar_select %p175, %s170, 362
        %s177 = smul.addr %s176, 8
        %s178 = scalar_lea.vmem %s0, %s177
        %p179 = pneg %p46
        %p180 = pneg %p43
        %s181 = smul.u32 182, %s17
        %s182 = smul.u32 2, %s18
        %s183 = ssub.s32 363, %s181
        %p184 = scmp.lt.s32.totalorder %s183, 182
        %s185 = scalar_select %p184, %s183, 182
        %s186 = smul.u32 8, %s185
        %s187 = smul.u32 %s186, 2
        %p188 = scmp.lt.s32.totalorder %s181, 362
        %s189 = scalar_select %p188, %s181, 362
        %p190 = scmp.lt.s32.totalorder %s182, 1
        %s191 = scalar_select %p190, %s182, 1
        %s192 = smul.addr %s189, 2
        %s193 = sadd.s32 %s191, %s192
        %s194 = smul.addr %s193, 8
        %s195 = scalar_lea.vmem %s1, %s194
        %p196 = pneg %p74
        %p197 = pneg %p71
        %p198 = pneg %p102
        %p199 = pneg %p99
        %s200 = sand.u32 %s89, 1
        %s201 = sand.u32 %s89, 1
        %s202 = smul.addr %s201, 2912
        %s203 = scalar_lea.vmem [#allocation2], %s202
        %s204 = smul.u32 182, %s17
        %s205 = ssub.s32 363, %s204
        %p206 = scmp.lt.s32.totalorder %s205, 182
        %s207 = scalar_select %p206, %s205, 182
        %s208 = smul.u32 8, %s207
        %p209 = scmp.lt.s32.totalorder %s204, 362
        %s210 = scalar_select %p209, %s204, 362
        %s211 = smul.addr %s210, 8
        %s212 = scalar_lea.vmem %s0, %s211
        %s213 = smul.u32 182, %s17
        %s214 = ssub.s32 363, %s213
        %p215 = scmp.lt.s32.totalorder %s214, 182
        %s216 = scalar_select %p215, %s214, 182
        %s217 = smul.u32 8, %s216
        %s218 = smul.u32 182, %s17
        %s219 = smul.u32 2, %s18
        %s220 = ssub.s32 363, %s218
        %p221 = scmp.lt.s32.totalorder %s220, 182
        %s222 = scalar_select %p221, %s220, 182
        %s223 = smul.u32 8, %s222
        %s224 = smul.u32 %s223, 2
        %p225 = scmp.lt.s32.totalorder %s218, 362
        %s226 = scalar_select %p225, %s218, 362
        %p227 = scmp.lt.s32.totalorder %s219, 1
        %s228 = scalar_select %p227, %s219, 1
        %s229 = smul.addr %s226, 2
        %s230 = sadd.s32 %s228, %s229
        %s231 = smul.addr %s230, 8
        %s232 = scalar_lea.vmem %s1, %s231
        %s233 = smul.u32 182, %s17
        %s234 = smul.u32 2, %s18
        %s235 = ssub.s32 363, %s233
        %p236 = scmp.lt.s32.totalorder %s235, 182
        %s237 = scalar_select %p236, %s235, 182
        %s238 = smul.u32 8, %s237
        %s239 = smul.u32 %s238, 2
        %s240 = smul.u32 182, %s17
        %s241 = smul.u32 2, %s18
        %s242 = ssub.s32 363, %s240
        %p243 = scmp.lt.s32.totalorder %s242, 182
        %s244 = scalar_select %p243, %s242, 182
        %s245 = smul.u32 8, %s244
        %s246 = smul.u32 %s245, 2
        %v247 = vld [vmem:[%s232] sm:$0xff]
        %v248 = vld [vmem:[%s232 + $0x8] sm:$0xff]
        %v249 = vld [vmem:[%s232 + $0x10] sm:$0xff]
        %v250 = vld [vmem:[%s232 + $0x18] sm:$0xff]
        %v251 = vld [vmem:[%s232 + $0x20] sm:$0xff]
        %v252 = vld [vmem:[%s232 + $0x28] sm:$0xff]
        %v253 = vld [vmem:[%s232 + $0x30] sm:$0xff]
        %v254 = vld [vmem:[%s232 + $0x38] sm:$0xff]
        %v255 = vld [vmem:[%s232 + $0x40] sm:$0xff]
        %v256 = vld [vmem:[%s232 + $0x48] sm:$0xff]
        %v257 = vld [vmem:[%s232 + $0x50] sm:$0xff]
        %v258 = vld [vmem:[%s232 + $0x58] sm:$0xff]
        %v259 = vld [vmem:[%s232 + $0x60] sm:$0xff]
        %v260 = vld [vmem:[%s232 + $0x68] sm:$0xff]
        %v261 = vld [vmem:[%s232 + $0x70] sm:$0xff]
        %v262 = vld [vmem:[%s232 + $0x78] sm:$0xff]
        %v263 = vld [vmem:[%s232 + $0x80] sm:$0xff]
        %v264 = vld [vmem:[%s232 + $0x88] sm:$0xff]
        %v265 = vld [vmem:[%s232 + $0x90] sm:$0xff]
        %v266 = vld [vmem:[%s232 + $0x98] sm:$0xff]
        %v267 = vld [vmem:[%s232 + $0xa0] sm:$0xff]
        %v268 = vld [vmem:[%s232 + $0xa8] sm:$0xff]
        %v269 = vld [vmem:[%s232 + $0xb0] sm:$0xff]
        %v270 = vld [vmem:[%s232 + $0xb8] sm:$0xff]
        %v271 = vld [vmem:[%s232 + $0xc0] sm:$0xff]
        %v272 = vld [vmem:[%s232 + $0xc8] sm:$0xff]
        %v273 = vld [vmem:[%s232 + $0xd0] sm:$0xff]
        %v274 = vld [vmem:[%s232 + $0xd8] sm:$0xff]
        %v275 = vld [vmem:[%s232 + $0xe0] sm:$0xff]
        %v276 = vld [vmem:[%s232 + $0xe8] sm:$0xff]
        %v277 = vld [vmem:[%s232 + $0xf0] sm:$0xff]
        %v278 = vld [vmem:[%s232 + $0xf8] sm:$0xff]
        %v279 = vld [vmem:[%s232 + $0x100] sm:$0xff]
        %v280 = vld [vmem:[%s232 + $0x108] sm:$0xff]
        %v281 = vld [vmem:[%s232 + $0x110] sm:$0xff]
        %v282 = vld [vmem:[%s232 + $0x118] sm:$0xff]
        %v283 = vld [vmem:[%s232 + $0x120] sm:$0xff]
        %v284 = vld [vmem:[%s232 + $0x128] sm:$0xff]
        %v285 = vld [vmem:[%s232 + $0x130] sm:$0xff]
        %v286 = vld [vmem:[%s232 + $0x138] sm:$0xff]
        %v287 = vld [vmem:[%s232 + $0x140] sm:$0xff]
        %v288 = vld [vmem:[%s232 + $0x148] sm:$0xff]
        %v289 = vld [vmem:[%s232 + $0x150] sm:$0xff]
        %v290 = vld [vmem:[%s232 + $0x158] sm:$0xff]
        %v291 = vld [vmem:[%s232 + $0x160] sm:$0xff]
        %v292 = vld [vmem:[%s232 + $0x168] sm:$0xff]
        %v293 = vld [vmem:[%s232 + $0x170] sm:$0xff]
        %v294 = vld [vmem:[%s232 + $0x178] sm:$0xff]
        %v295 = vld [vmem:[%s232 + $0x180] sm:$0xff]
        %v296 = vld [vmem:[%s232 + $0x188] sm:$0xff]
        %v297 = vld [vmem:[%s232 + $0x190] sm:$0xff]
        %v298 = vld [vmem:[%s232 + $0x198] sm:$0xff]
        %v299 = vld [vmem:[%s232 + $0x1a0] sm:$0xff]
        %v300 = vld [vmem:[%s232 + $0x1a8] sm:$0xff]
        %v301 = vld [vmem:[%s232 + $0x1b0] sm:$0xff]
        %v302 = vld [vmem:[%s232 + $0x1b8] sm:$0xff]
        %v303 = vld [vmem:[%s232 + $0x1c0] sm:$0xff]
        %v304 = vld [vmem:[%s232 + $0x1c8] sm:$0xff]
        %v305 = vld [vmem:[%s232 + $0x1d0] sm:$0xff]
        %v306 = vld [vmem:[%s232 + $0x1d8] sm:$0xff]
        %v307 = vld [vmem:[%s232 + $0x1e0] sm:$0xff]
        %v308 = vld [vmem:[%s232 + $0x1e8] sm:$0xff]
        %v309 = vld [vmem:[%s232 + $0x1f0] sm:$0xff]
        %v310 = vld [vmem:[%s232 + $0x1f8] sm:$0xff]
        %v311 = vld [vmem:[%s232 + $0x200] sm:$0xff]
        %v312 = vld [vmem:[%s232 + $0x208] sm:$0xff]
        %v313 = vld [vmem:[%s232 + $0x210] sm:$0xff]
        %v314 = vld [vmem:[%s232 + $0x218] sm:$0xff]
        %v315 = vld [vmem:[%s232 + $0x220] sm:$0xff]
        %v316 = vld [vmem:[%s232 + $0x228] sm:$0xff]
        %v317 = vld [vmem:[%s232 + $0x230] sm:$0xff]
        %v318 = vld [vmem:[%s232 + $0x238] sm:$0xff]
        %v319 = vld [vmem:[%s232 + $0x240] sm:$0xff]
        %v320 = vld [vmem:[%s232 + $0x248] sm:$0xff]
        %v321 = vld [vmem:[%s232 + $0x250] sm:$0xff]
        %v322 = vld [vmem:[%s232 + $0x258] sm:$0xff]
        %v323 = vld [vmem:[%s232 + $0x260] sm:$0xff]
        %v324 = vld [vmem:[%s232 + $0x268] sm:$0xff]
        %v325 = vld [vmem:[%s232 + $0x270] sm:$0xff]
        %v326 = vld [vmem:[%s232 + $0x278] sm:$0xff]
        %v327 = vld [vmem:[%s232 + $0x280] sm:$0xff]
        %v328 = vld [vmem:[%s232 + $0x288] sm:$0xff]
        %v329 = vld [vmem:[%s232 + $0x290] sm:$0xff]
        %v330 = vld [vmem:[%s232 + $0x298] sm:$0xff]
        %v331 = vld [vmem:[%s232 + $0x2a0] sm:$0xff]
        %v332 = vld [vmem:[%s232 + $0x2a8] sm:$0xff]
        %v333 = vld [vmem:[%s232 + $0x2b0] sm:$0xff]
        %v334 = vld [vmem:[%s232 + $0x2b8] sm:$0xff]
        %v335 = vld [vmem:[%s232 + $0x2c0] sm:$0xff]
        %v336 = vld [vmem:[%s232 + $0x2c8] sm:$0xff]
        %v337 = vld [vmem:[%s232 + $0x2d0] sm:$0xff]
        %v338 = vld [vmem:[%s232 + $0x2d8] sm:$0xff]
        %v339 = vld [vmem:[%s232 + $0x2e0] sm:$0xff]
        %v340 = vld [vmem:[%s232 + $0x2e8] sm:$0xff]
        %v341 = vld [vmem:[%s232 + $0x2f0] sm:$0xff]
        %v342 = vld [vmem:[%s232 + $0x2f8] sm:$0xff]
        %v343 = vld [vmem:[%s232 + $0x300] sm:$0xff]
        %v344 = vld [vmem:[%s232 + $0x308] sm:$0xff]
        %v345 = vld [vmem:[%s232 + $0x310] sm:$0xff]
        %v346 = vld [vmem:[%s232 + $0x318] sm:$0xff]
        %v347 = vld [vmem:[%s232 + $0x320] sm:$0xff]
        %v348 = vld [vmem:[%s232 + $0x328] sm:$0xff]
        %v349 = vld [vmem:[%s232 + $0x330] sm:$0xff]
        %v350 = vld [vmem:[%s232 + $0x338] sm:$0xff]
        %v351 = vld [vmem:[%s232 + $0x340] sm:$0xff]
        %v352 = vld [vmem:[%s232 + $0x348] sm:$0xff]
        %v353 = vld [vmem:[%s232 + $0x350] sm:$0xff]
        %v354 = vld [vmem:[%s232 + $0x358] sm:$0xff]
        %v355 = vld [vmem:[%s232 + $0x360] sm:$0xff]
        %v356 = vld [vmem:[%s232 + $0x368] sm:$0xff]
        %v357 = vld [vmem:[%s232 + $0x370] sm:$0xff]
        %v358 = vld [vmem:[%s232 + $0x378] sm:$0xff]
        %v359 = vld [vmem:[%s232 + $0x380] sm:$0xff]
        %v360 = vld [vmem:[%s232 + $0x388] sm:$0xff]
        %v361 = vld [vmem:[%s232 + $0x390] sm:$0xff]
        %v362 = vld [vmem:[%s232 + $0x398] sm:$0xff]
        %v363 = vld [vmem:[%s232 + $0x3a0] sm:$0xff]
        %v364 = vld [vmem:[%s232 + $0x3a8] sm:$0xff]
        %v365 = vld [vmem:[%s232 + $0x3b0] sm:$0xff]
        %v366 = vld [vmem:[%s232 + $0x3b8] sm:$0xff]
        %v367 = vld [vmem:[%s232 + $0x3c0] sm:$0xff]
        %v368 = vld [vmem:[%s232 + $0x3c8] sm:$0xff]
        %v369 = vld [vmem:[%s232 + $0x3d0] sm:$0xff]
        %v370 = vld [vmem:[%s232 + $0x3d8] sm:$0xff]
        %v371 = vld [vmem:[%s232 + $0x3e0] sm:$0xff]
        %v372 = vld [vmem:[%s232 + $0x3e8] sm:$0xff]
        %v373 = vld [vmem:[%s232 + $0x3f0] sm:$0xff]
        %v374 = vld [vmem:[%s232 + $0x3f8] sm:$0xff]
        %v375 = vld [vmem:[%s232 + $0x400] sm:$0xff]
        %v376 = vld [vmem:[%s232 + $0x408] sm:$0xff]
        %v377 = vld [vmem:[%s232 + $0x410] sm:$0xff]
        %v378 = vld [vmem:[%s232 + $0x418] sm:$0xff]
        %v379 = vld [vmem:[%s232 + $0x420] sm:$0xff]
        %v380 = vld [vmem:[%s232 + $0x428] sm:$0xff]
        %v381 = vld [vmem:[%s232 + $0x430] sm:$0xff]
        %v382 = vld [vmem:[%s232 + $0x438] sm:$0xff]
        %v383 = vld [vmem:[%s232 + $0x440] sm:$0xff]
        %v384 = vld [vmem:[%s232 + $0x448] sm:$0xff]
        %v385 = vld [vmem:[%s232 + $0x450] sm:$0xff]
        %v386 = vld [vmem:[%s232 + $0x458] sm:$0xff]
        %v387 = vld [vmem:[%s232 + $0x460] sm:$0xff]
        %v388 = vld [vmem:[%s232 + $0x468] sm:$0xff]
        %v389 = vld [vmem:[%s232 + $0x470] sm:$0xff]
        %v390 = vld [vmem:[%s232 + $0x478] sm:$0xff]
        %v391 = vld [vmem:[%s232 + $0x480] sm:$0xff]
        %v392 = vld [vmem:[%s232 + $0x488] sm:$0xff]
        %v393 = vld [vmem:[%s232 + $0x490] sm:$0xff]
        %v394 = vld [vmem:[%s232 + $0x498] sm:$0xff]
        %v395 = vld [vmem:[%s232 + $0x4a0] sm:$0xff]
        %v396 = vld [vmem:[%s232 + $0x4a8] sm:$0xff]
        %v397 = vld [vmem:[%s232 + $0x4b0] sm:$0xff]
        %v398 = vld [vmem:[%s232 + $0x4b8] sm:$0xff]
        %v399 = vld [vmem:[%s232 + $0x4c0] sm:$0xff]
        %v400 = vld [vmem:[%s232 + $0x4c8] sm:$0xff]
        %v401 = vld [vmem:[%s232 + $0x4d0] sm:$0xff]
        %v402 = vld [vmem:[%s232 + $0x4d8] sm:$0xff]
        %v403 = vld [vmem:[%s232 + $0x4e0] sm:$0xff]
        %v404 = vld [vmem:[%s232 + $0x4e8] sm:$0xff]
        %v405 = vld [vmem:[%s232 + $0x4f0] sm:$0xff]
        %v406 = vld [vmem:[%s232 + $0x4f8] sm:$0xff]
        %v407 = vld [vmem:[%s232 + $0x500] sm:$0xff]
        %v408 = vld [vmem:[%s232 + $0x508] sm:$0xff]
        %v409 = vld [vmem:[%s232 + $0x510] sm:$0xff]
        %v410 = vld [vmem:[%s232 + $0x518] sm:$0xff]
        %v411 = vld [vmem:[%s232 + $0x520] sm:$0xff]
        %v412 = vld [vmem:[%s232 + $0x528] sm:$0xff]
        %v413 = vld [vmem:[%s232 + $0x530] sm:$0xff]
        %v414 = vld [vmem:[%s232 + $0x538] sm:$0xff]
        %v415 = vld [vmem:[%s232 + $0x540] sm:$0xff]
        %v416 = vld [vmem:[%s232 + $0x548] sm:$0xff]
        %v417 = vld [vmem:[%s232 + $0x550] sm:$0xff]
        %v418 = vld [vmem:[%s232 + $0x558] sm:$0xff]
        %v419 = vld [vmem:[%s232 + $0x560] sm:$0xff]
        %v420 = vld [vmem:[%s232 + $0x568] sm:$0xff]
        %v421 = vld [vmem:[%s232 + $0x570] sm:$0xff]
        %v422 = vld [vmem:[%s232 + $0x578] sm:$0xff]
        %v423 = vld [vmem:[%s232 + $0x580] sm:$0xff]
        %v424 = vld [vmem:[%s232 + $0x588] sm:$0xff]
        %v425 = vld [vmem:[%s232 + $0x590] sm:$0xff]
        %v426 = vld [vmem:[%s232 + $0x598] sm:$0xff]
        %v427 = vld [vmem:[%s232 + $0x5a0] sm:$0xff]
        %v428 = vld [vmem:[%s232 + $0x5a8] sm:$0xff]
        %v429 = vld [vmem:[%s232 + $0x5b0] sm:$0xff]
        %v430 = vld [vmem:[%s232 + $0x5b8] sm:$0xff]
        %v431 = vld [vmem:[%s232 + $0x5c0] sm:$0xff]
        %v432 = vld [vmem:[%s232 + $0x5c8] sm:$0xff]
        %v433 = vld [vmem:[%s232 + $0x5d0] sm:$0xff]
        %v434 = vld [vmem:[%s232 + $0x5d8] sm:$0xff]
        %v435 = vld [vmem:[%s232 + $0x5e0] sm:$0xff]
        %v436 = vld [vmem:[%s232 + $0x5e8] sm:$0xff]
        %v437 = vld [vmem:[%s232 + $0x5f0] sm:$0xff]
        %v438 = vld [vmem:[%s232 + $0x5f8] sm:$0xff]
        %v439 = vld [vmem:[%s232 + $0x600] sm:$0xff]
        %v440 = vld [vmem:[%s232 + $0x608] sm:$0xff]
        %v441 = vld [vmem:[%s232 + $0x610] sm:$0xff]
        %v442 = vld [vmem:[%s232 + $0x618] sm:$0xff]
        %v443 = vld [vmem:[%s232 + $0x620] sm:$0xff]
        %v444 = vld [vmem:[%s232 + $0x628] sm:$0xff]
        %v445 = vld [vmem:[%s232 + $0x630] sm:$0xff]
        %v446 = vld [vmem:[%s232 + $0x638] sm:$0xff]
        %v447 = vld [vmem:[%s232 + $0x640] sm:$0xff]
        %v448 = vld [vmem:[%s232 + $0x648] sm:$0xff]
        %v449 = vld [vmem:[%s232 + $0x650] sm:$0xff]
        %v450 = vld [vmem:[%s232 + $0x658] sm:$0xff]
        %v451 = vld [vmem:[%s232 + $0x660] sm:$0xff]
        %v452 = vld [vmem:[%s232 + $0x668] sm:$0xff]
        %v453 = vld [vmem:[%s232 + $0x670] sm:$0xff]
        %v454 = vld [vmem:[%s232 + $0x678] sm:$0xff]
        %v455 = vld [vmem:[%s232 + $0x680] sm:$0xff]
        %v456 = vld [vmem:[%s232 + $0x688] sm:$0xff]
        %v457 = vld [vmem:[%s232 + $0x690] sm:$0xff]
        %v458 = vld [vmem:[%s232 + $0x698] sm:$0xff]
        %v459 = vld [vmem:[%s232 + $0x6a0] sm:$0xff]
        %v460 = vld [vmem:[%s232 + $0x6a8] sm:$0xff]
        %v461 = vld [vmem:[%s232 + $0x6b0] sm:$0xff]
        %v462 = vld [vmem:[%s232 + $0x6b8] sm:$0xff]
        %v463 = vld [vmem:[%s232 + $0x6c0] sm:$0xff]
        %v464 = vld [vmem:[%s232 + $0x6c8] sm:$0xff]
        %v465 = vld [vmem:[%s232 + $0x6d0] sm:$0xff]
        %v466 = vld [vmem:[%s232 + $0x6d8] sm:$0xff]
        %v467 = vld [vmem:[%s232 + $0x6e0] sm:$0xff]
        %v468 = vld [vmem:[%s232 + $0x6e8] sm:$0xff]
        %v469 = vld [vmem:[%s232 + $0x6f0] sm:$0xff]
        %v470 = vld [vmem:[%s232 + $0x6f8] sm:$0xff]
        %v471 = vld [vmem:[%s232 + $0x700] sm:$0xff]
        %v472 = vld [vmem:[%s232 + $0x708] sm:$0xff]
        %v473 = vld [vmem:[%s232 + $0x710] sm:$0xff]
        %v474 = vld [vmem:[%s232 + $0x718] sm:$0xff]
        %v475 = vld [vmem:[%s232 + $0x720] sm:$0xff]
        %v476 = vld [vmem:[%s232 + $0x728] sm:$0xff]
        %v477 = vld [vmem:[%s232 + $0x730] sm:$0xff]
        %v478 = vld [vmem:[%s232 + $0x738] sm:$0xff]
        %v479 = vld [vmem:[%s232 + $0x740] sm:$0xff]
        %v480 = vld [vmem:[%s232 + $0x748] sm:$0xff]
        %v481 = vld [vmem:[%s232 + $0x750] sm:$0xff]
        %v482 = vld [vmem:[%s232 + $0x758] sm:$0xff]
        %v483 = vld [vmem:[%s232 + $0x760] sm:$0xff]
        %v484 = vld [vmem:[%s232 + $0x768] sm:$0xff]
        %v485 = vld [vmem:[%s232 + $0x770] sm:$0xff]
        %v486 = vld [vmem:[%s232 + $0x778] sm:$0xff]
        %v487 = vld [vmem:[%s232 + $0x780] sm:$0xff]
        %v488 = vld [vmem:[%s232 + $0x788] sm:$0xff]
        %v489 = vld [vmem:[%s232 + $0x790] sm:$0xff]
        %v490 = vld [vmem:[%s232 + $0x798] sm:$0xff]
        %v491 = vld [vmem:[%s232 + $0x7a0] sm:$0xff]
        %v492 = vld [vmem:[%s232 + $0x7a8] sm:$0xff]
        %v493 = vld [vmem:[%s232 + $0x7b0] sm:$0xff]
        %v494 = vld [vmem:[%s232 + $0x7b8] sm:$0xff]
        %v495 = vld [vmem:[%s232 + $0x7c0] sm:$0xff]
        %v496 = vld [vmem:[%s232 + $0x7c8] sm:$0xff]
        %v497 = vld [vmem:[%s232 + $0x7d0] sm:$0xff]
        %v498 = vld [vmem:[%s232 + $0x7d8] sm:$0xff]
        %v499 = vld [vmem:[%s232 + $0x7e0] sm:$0xff]
        %v500 = vld [vmem:[%s232 + $0x7e8] sm:$0xff]
        %v501 = vld [vmem:[%s232 + $0x7f0] sm:$0xff]
        %v502 = vld [vmem:[%s232 + $0x7f8] sm:$0xff]
        %v503 = vld [vmem:[%s232 + $0x800] sm:$0xff]
        %v504 = vld [vmem:[%s232 + $0x808] sm:$0xff]
        %v505 = vld [vmem:[%s232 + $0x810] sm:$0xff]
        %v506 = vld [vmem:[%s232 + $0x818] sm:$0xff]
        %v507 = vld [vmem:[%s232 + $0x820] sm:$0xff]
        %v508 = vld [vmem:[%s232 + $0x828] sm:$0xff]
        %v509 = vld [vmem:[%s232 + $0x830] sm:$0xff]
        %v510 = vld [vmem:[%s232 + $0x838] sm:$0xff]
        %v511 = vld [vmem:[%s232 + $0x840] sm:$0xff]
        %v512 = vld [vmem:[%s232 + $0x848] sm:$0xff]
        %v513 = vld [vmem:[%s232 + $0x850] sm:$0xff]
        %v514 = vld [vmem:[%s232 + $0x858] sm:$0xff]
        %v515 = vld [vmem:[%s232 + $0x860] sm:$0xff]
        %v516 = vld [vmem:[%s232 + $0x868] sm:$0xff]
        %v517 = vld [vmem:[%s232 + $0x870] sm:$0xff]
        %v518 = vld [vmem:[%s232 + $0x878] sm:$0xff]
        %v519 = vld [vmem:[%s232 + $0x880] sm:$0xff]
        %v520 = vld [vmem:[%s232 + $0x888] sm:$0xff]
        %v521 = vld [vmem:[%s232 + $0x890] sm:$0xff]
        %v522 = vld [vmem:[%s232 + $0x898] sm:$0xff]
        %v523 = vld [vmem:[%s232 + $0x8a0] sm:$0xff]
        %v524 = vld [vmem:[%s232 + $0x8a8] sm:$0xff]
        %v525 = vld [vmem:[%s232 + $0x8b0] sm:$0xff]
        %v526 = vld [vmem:[%s232 + $0x8b8] sm:$0xff]
        %v527 = vld [vmem:[%s232 + $0x8c0] sm:$0xff]
        %v528 = vld [vmem:[%s232 + $0x8c8] sm:$0xff]
        %v529 = vld [vmem:[%s232 + $0x8d0] sm:$0xff]
        %v530 = vld [vmem:[%s232 + $0x8d8] sm:$0xff]
        %v531 = vld [vmem:[%s232 + $0x8e0] sm:$0xff]
        %v532 = vld [vmem:[%s232 + $0x8e8] sm:$0xff]
        %v533 = vld [vmem:[%s232 + $0x8f0] sm:$0xff]
        %v534 = vld [vmem:[%s232 + $0x8f8] sm:$0xff]
        %v535 = vld [vmem:[%s232 + $0x900] sm:$0xff]
        %v536 = vld [vmem:[%s232 + $0x908] sm:$0xff]
        %v537 = vld [vmem:[%s232 + $0x910] sm:$0xff]
        %v538 = vld [vmem:[%s232 + $0x918] sm:$0xff]
        %v539 = vld [vmem:[%s232 + $0x920] sm:$0xff]
        %v540 = vld [vmem:[%s232 + $0x928] sm:$0xff]
        %v541 = vld [vmem:[%s232 + $0x930] sm:$0xff]
        %v542 = vld [vmem:[%s232 + $0x938] sm:$0xff]
        %v543 = vld [vmem:[%s232 + $0x940] sm:$0xff]
        %v544 = vld [vmem:[%s232 + $0x948] sm:$0xff]
        %v545 = vld [vmem:[%s232 + $0x950] sm:$0xff]
        %v546 = vld [vmem:[%s232 + $0x958] sm:$0xff]
        %v547 = vld [vmem:[%s232 + $0x960] sm:$0xff]
        %v548 = vld [vmem:[%s232 + $0x968] sm:$0xff]
        %v549 = vld [vmem:[%s232 + $0x970] sm:$0xff]
        %v550 = vld [vmem:[%s232 + $0x978] sm:$0xff]
        %v551 = vld [vmem:[%s232 + $0x980] sm:$0xff]
        %v552 = vld [vmem:[%s232 + $0x988] sm:$0xff]
        %v553 = vld [vmem:[%s232 + $0x990] sm:$0xff]
        %v554 = vld [vmem:[%s232 + $0x998] sm:$0xff]
        %v555 = vld [vmem:[%s232 + $0x9a0] sm:$0xff]
        %v556 = vld [vmem:[%s232 + $0x9a8] sm:$0xff]
        %v557 = vld [vmem:[%s232 + $0x9b0] sm:$0xff]
        %v558 = vld [vmem:[%s232 + $0x9b8] sm:$0xff]
        %v559 = vld [vmem:[%s232 + $0x9c0] sm:$0xff]
        %v560 = vld [vmem:[%s232 + $0x9c8] sm:$0xff]
        %v561 = vld [vmem:[%s232 + $0x9d0] sm:$0xff]
        %v562 = vld [vmem:[%s232 + $0x9d8] sm:$0xff]
        %v563 = vld [vmem:[%s232 + $0x9e0] sm:$0xff]
        %v564 = vld [vmem:[%s232 + $0x9e8] sm:$0xff]
        %v565 = vld [vmem:[%s232 + $0x9f0] sm:$0xff]
        %v566 = vld [vmem:[%s232 + $0x9f8] sm:$0xff]
        %v567 = vld [vmem:[%s232 + $0xa00] sm:$0xff]
        %v568 = vld [vmem:[%s232 + $0xa08] sm:$0xff]
        %v569 = vld [vmem:[%s232 + $0xa10] sm:$0xff]
        %v570 = vld [vmem:[%s232 + $0xa18] sm:$0xff]
        %v571 = vld [vmem:[%s232 + $0xa20] sm:$0xff]
        %v572 = vld [vmem:[%s232 + $0xa28] sm:$0xff]
        %v573 = vld [vmem:[%s232 + $0xa30] sm:$0xff]
        %v574 = vld [vmem:[%s232 + $0xa38] sm:$0xff]
        %v575 = vld [vmem:[%s232 + $0xa40] sm:$0xff]
        %v576 = vld [vmem:[%s232 + $0xa48] sm:$0xff]
        %v577 = vld [vmem:[%s232 + $0xa50] sm:$0xff]
        %v578 = vld [vmem:[%s232 + $0xa58] sm:$0xff]
        %v579 = vld [vmem:[%s232 + $0xa60] sm:$0xff]
        %v580 = vld [vmem:[%s232 + $0xa68] sm:$0xff]
        %v581 = vld [vmem:[%s232 + $0xa70] sm:$0xff]
        %v582 = vld [vmem:[%s232 + $0xa78] sm:$0xff]
        %v583 = vld [vmem:[%s232 + $0xa80] sm:$0xff]
        %v584 = vld [vmem:[%s232 + $0xa88] sm:$0xff]
        %v585 = vld [vmem:[%s232 + $0xa90] sm:$0xff]
        %v586 = vld [vmem:[%s232 + $0xa98] sm:$0xff]
        %v587 = vld [vmem:[%s232 + $0xaa0] sm:$0xff]
        %v588 = vld [vmem:[%s232 + $0xaa8] sm:$0xff]
        %v589 = vld [vmem:[%s232 + $0xab0] sm:$0xff]
        %v590 = vld [vmem:[%s232 + $0xab8] sm:$0xff]
        %v591 = vld [vmem:[%s232 + $0xac0] sm:$0xff]
        %v592 = vld [vmem:[%s232 + $0xac8] sm:$0xff]
        %v593 = vld [vmem:[%s232 + $0xad0] sm:$0xff]
        %v594 = vld [vmem:[%s232 + $0xad8] sm:$0xff]
        %v595 = vld [vmem:[%s232 + $0xae0] sm:$0xff]
        %v596 = vld [vmem:[%s232 + $0xae8] sm:$0xff]
        %v597 = vld [vmem:[%s232 + $0xaf0] sm:$0xff]
        %v598 = vld [vmem:[%s232 + $0xaf8] sm:$0xff]
        %v599 = vld [vmem:[%s232 + $0xb00] sm:$0xff]
        %v600 = vld [vmem:[%s232 + $0xb08] sm:$0xff]
        %v601 = vld [vmem:[%s232 + $0xb10] sm:$0xff]
        %v602 = vld [vmem:[%s232 + $0xb18] sm:$0xff]
        %v603 = vld [vmem:[%s232 + $0xb20] sm:$0xff]
        %v604 = vld [vmem:[%s232 + $0xb28] sm:$0xff]
        %v605 = vld [vmem:[%s232 + $0xb30] sm:$0xff]
        %v606 = vld [vmem:[%s232 + $0xb38] sm:$0xff]
        %v607 = vld [vmem:[%s232 + $0xb40] sm:$0xff]
        %v608 = vld [vmem:[%s232 + $0xb48] sm:$0xff]
        %v609 = vld [vmem:[%s232 + $0xb50] sm:$0xff]
        %v610 = vld [vmem:[%s232 + $0xb58] sm:$0xff]
        %v611 = vld [vmem:[%s212] sm:$0xff]
        %v612 = vld [vmem:[%s212 + $0x8] sm:$0xff]
        %v613 = vld [vmem:[%s212 + $0x10] sm:$0xff]
        %v614 = vld [vmem:[%s212 + $0x18] sm:$0xff]
        %v615 = vld [vmem:[%s212 + $0x20] sm:$0xff]
        %v616 = vld [vmem:[%s212 + $0x28] sm:$0xff]
        %v617 = vld [vmem:[%s212 + $0x30] sm:$0xff]
        %v618 = vld [vmem:[%s212 + $0x38] sm:$0xff]
        %v619 = vld [vmem:[%s212 + $0x40] sm:$0xff]
        %v620 = vld [vmem:[%s212 + $0x48] sm:$0xff]
        %v621 = vld [vmem:[%s212 + $0x50] sm:$0xff]
        %v622 = vld [vmem:[%s212 + $0x58] sm:$0xff]
        %v623 = vld [vmem:[%s212 + $0x60] sm:$0xff]
        %v624 = vld [vmem:[%s212 + $0x68] sm:$0xff]
        %v625 = vld [vmem:[%s212 + $0x70] sm:$0xff]
        %v626 = vld [vmem:[%s212 + $0x78] sm:$0xff]
        %v627 = vld [vmem:[%s212 + $0x80] sm:$0xff]
        %v628 = vld [vmem:[%s212 + $0x88] sm:$0xff]
        %v629 = vld [vmem:[%s212 + $0x90] sm:$0xff]
        %v630 = vld [vmem:[%s212 + $0x98] sm:$0xff]
        %v631 = vld [vmem:[%s212 + $0xa0] sm:$0xff]
        %v632 = vld [vmem:[%s212 + $0xa8] sm:$0xff]
        %v633 = vld [vmem:[%s212 + $0xb0] sm:$0xff]
        %v634 = vld [vmem:[%s212 + $0xb8] sm:$0xff]
        %v635 = vld [vmem:[%s212 + $0xc0] sm:$0xff]
        %v636 = vld [vmem:[%s212 + $0xc8] sm:$0xff]
        %v637 = vld [vmem:[%s212 + $0xd0] sm:$0xff]
        %v638 = vld [vmem:[%s212 + $0xd8] sm:$0xff]
        %v639 = vld [vmem:[%s212 + $0xe0] sm:$0xff]
        %v640 = vld [vmem:[%s212 + $0xe8] sm:$0xff]
        %v641 = vld [vmem:[%s212 + $0xf0] sm:$0xff]
        %v642 = vld [vmem:[%s212 + $0xf8] sm:$0xff]
        %v643 = vld [vmem:[%s212 + $0x100] sm:$0xff]
        %v644 = vld [vmem:[%s212 + $0x108] sm:$0xff]
        %v645 = vld [vmem:[%s212 + $0x110] sm:$0xff]
        %v646 = vld [vmem:[%s212 + $0x118] sm:$0xff]
        %v647 = vld [vmem:[%s212 + $0x120] sm:$0xff]
        %v648 = vld [vmem:[%s212 + $0x128] sm:$0xff]
        %v649 = vld [vmem:[%s212 + $0x130] sm:$0xff]
        %v650 = vld [vmem:[%s212 + $0x138] sm:$0xff]
        %v651 = vld [vmem:[%s212 + $0x140] sm:$0xff]
        %v652 = vld [vmem:[%s212 + $0x148] sm:$0xff]
        %v653 = vld [vmem:[%s212 + $0x150] sm:$0xff]
        %v654 = vld [vmem:[%s212 + $0x158] sm:$0xff]
        %v655 = vld [vmem:[%s212 + $0x160] sm:$0xff]
        %v656 = vld [vmem:[%s212 + $0x168] sm:$0xff]
        %v657 = vld [vmem:[%s212 + $0x170] sm:$0xff]
        %v658 = vld [vmem:[%s212 + $0x178] sm:$0xff]
        %v659 = vld [vmem:[%s212 + $0x180] sm:$0xff]
        %v660 = vld [vmem:[%s212 + $0x188] sm:$0xff]
        %v661 = vld [vmem:[%s212 + $0x190] sm:$0xff]
        %v662 = vld [vmem:[%s212 + $0x198] sm:$0xff]
        %v663 = vld [vmem:[%s212 + $0x1a0] sm:$0xff]
        %v664 = vld [vmem:[%s212 + $0x1a8] sm:$0xff]
        %v665 = vld [vmem:[%s212 + $0x1b0] sm:$0xff]
        %v666 = vld [vmem:[%s212 + $0x1b8] sm:$0xff]
        %v667 = vld [vmem:[%s212 + $0x1c0] sm:$0xff]
        %v668 = vld [vmem:[%s212 + $0x1c8] sm:$0xff]
        %v669 = vld [vmem:[%s212 + $0x1d0] sm:$0xff]
        %v670 = vld [vmem:[%s212 + $0x1d8] sm:$0xff]
        %v671 = vld [vmem:[%s212 + $0x1e0] sm:$0xff]
        %v672 = vld [vmem:[%s212 + $0x1e8] sm:$0xff]
        %v673 = vld [vmem:[%s212 + $0x1f0] sm:$0xff]
        %v674 = vld [vmem:[%s212 + $0x1f8] sm:$0xff]
        %v675 = vld [vmem:[%s212 + $0x200] sm:$0xff]
        %v676 = vld [vmem:[%s212 + $0x208] sm:$0xff]
        %v677 = vld [vmem:[%s212 + $0x210] sm:$0xff]
        %v678 = vld [vmem:[%s212 + $0x218] sm:$0xff]
        %v679 = vld [vmem:[%s212 + $0x220] sm:$0xff]
        %v680 = vld [vmem:[%s212 + $0x228] sm:$0xff]
        %v681 = vld [vmem:[%s212 + $0x230] sm:$0xff]
        %v682 = vld [vmem:[%s212 + $0x238] sm:$0xff]
        %v683 = vld [vmem:[%s212 + $0x240] sm:$0xff]
        %v684 = vld [vmem:[%s212 + $0x248] sm:$0xff]
        %v685 = vld [vmem:[%s212 + $0x250] sm:$0xff]
        %v686 = vld [vmem:[%s212 + $0x258] sm:$0xff]
        %v687 = vld [vmem:[%s212 + $0x260] sm:$0xff]
        %v688 = vld [vmem:[%s212 + $0x268] sm:$0xff]
        %v689 = vld [vmem:[%s212 + $0x270] sm:$0xff]
        %v690 = vld [vmem:[%s212 + $0x278] sm:$0xff]
        %v691 = vld [vmem:[%s212 + $0x280] sm:$0xff]
        %v692 = vld [vmem:[%s212 + $0x288] sm:$0xff]
        %v693 = vld [vmem:[%s212 + $0x290] sm:$0xff]
        %v694 = vld [vmem:[%s212 + $0x298] sm:$0xff]
        %v695 = vld [vmem:[%s212 + $0x2a0] sm:$0xff]
        %v696 = vld [vmem:[%s212 + $0x2a8] sm:$0xff]
        %v697 = vld [vmem:[%s212 + $0x2b0] sm:$0xff]
        %v698 = vld [vmem:[%s212 + $0x2b8] sm:$0xff]
        %v699 = vld [vmem:[%s212 + $0x2c0] sm:$0xff]
        %v700 = vld [vmem:[%s212 + $0x2c8] sm:$0xff]
        %v701 = vld [vmem:[%s212 + $0x2d0] sm:$0xff]
        %v702 = vld [vmem:[%s212 + $0x2d8] sm:$0xff]
        %v703 = vld [vmem:[%s212 + $0x2e0] sm:$0xff]
        %v704 = vld [vmem:[%s212 + $0x2e8] sm:$0xff]
        %v705 = vld [vmem:[%s212 + $0x2f0] sm:$0xff]
        %v706 = vld [vmem:[%s212 + $0x2f8] sm:$0xff]
        %v707 = vld [vmem:[%s212 + $0x300] sm:$0xff]
        %v708 = vld [vmem:[%s212 + $0x308] sm:$0xff]
        %v709 = vld [vmem:[%s212 + $0x310] sm:$0xff]
        %v710 = vld [vmem:[%s212 + $0x318] sm:$0xff]
        %v711 = vld [vmem:[%s212 + $0x320] sm:$0xff]
        %v712 = vld [vmem:[%s212 + $0x328] sm:$0xff]
        %v713 = vld [vmem:[%s212 + $0x330] sm:$0xff]
        %v714 = vld [vmem:[%s212 + $0x338] sm:$0xff]
        %v715 = vld [vmem:[%s212 + $0x340] sm:$0xff]
        %v716 = vld [vmem:[%s212 + $0x348] sm:$0xff]
        %v717 = vld [vmem:[%s212 + $0x350] sm:$0xff]
        %v718 = vld [vmem:[%s212 + $0x358] sm:$0xff]
        %v719 = vld [vmem:[%s212 + $0x360] sm:$0xff]
        %v720 = vld [vmem:[%s212 + $0x368] sm:$0xff]
        %v721 = vld [vmem:[%s212 + $0x370] sm:$0xff]
        %v722 = vld [vmem:[%s212 + $0x378] sm:$0xff]
        %v723 = vld [vmem:[%s212 + $0x380] sm:$0xff]
        %v724 = vld [vmem:[%s212 + $0x388] sm:$0xff]
        %v725 = vld [vmem:[%s212 + $0x390] sm:$0xff]
        %v726 = vld [vmem:[%s212 + $0x398] sm:$0xff]
        %v727 = vld [vmem:[%s212 + $0x3a0] sm:$0xff]
        %v728 = vld [vmem:[%s212 + $0x3a8] sm:$0xff]
        %v729 = vld [vmem:[%s212 + $0x3b0] sm:$0xff]
        %v730 = vld [vmem:[%s212 + $0x3b8] sm:$0xff]
        %v731 = vld [vmem:[%s212 + $0x3c0] sm:$0xff]
        %v732 = vld [vmem:[%s212 + $0x3c8] sm:$0xff]
        %v733 = vld [vmem:[%s212 + $0x3d0] sm:$0xff]
        %v734 = vld [vmem:[%s212 + $0x3d8] sm:$0xff]
        %v735 = vld [vmem:[%s212 + $0x3e0] sm:$0xff]
        %v736 = vld [vmem:[%s212 + $0x3e8] sm:$0xff]
        %v737 = vld [vmem:[%s212 + $0x3f0] sm:$0xff]
        %v738 = vld [vmem:[%s212 + $0x3f8] sm:$0xff]
        %v739 = vld [vmem:[%s212 + $0x400] sm:$0xff]
        %v740 = vld [vmem:[%s212 + $0x408] sm:$0xff]
        %v741 = vld [vmem:[%s212 + $0x410] sm:$0xff]
        %v742 = vld [vmem:[%s212 + $0x418] sm:$0xff]
        %v743 = vld [vmem:[%s212 + $0x420] sm:$0xff]
        %v744 = vld [vmem:[%s212 + $0x428] sm:$0xff]
        %v745 = vld [vmem:[%s212 + $0x430] sm:$0xff]
        %v746 = vld [vmem:[%s212 + $0x438] sm:$0xff]
        %v747 = vld [vmem:[%s212 + $0x440] sm:$0xff]
        %v748 = vld [vmem:[%s212 + $0x448] sm:$0xff]
        %v749 = vld [vmem:[%s212 + $0x450] sm:$0xff]
        %v750 = vld [vmem:[%s212 + $0x458] sm:$0xff]
        %v751 = vld [vmem:[%s212 + $0x460] sm:$0xff]
        %v752 = vld [vmem:[%s212 + $0x468] sm:$0xff]
        %v753 = vld [vmem:[%s212 + $0x470] sm:$0xff]
        %v754 = vld [vmem:[%s212 + $0x478] sm:$0xff]
        %v755 = vld [vmem:[%s212 + $0x480] sm:$0xff]
        %v756 = vld [vmem:[%s212 + $0x488] sm:$0xff]
        %v757 = vld [vmem:[%s212 + $0x490] sm:$0xff]
        %v758 = vld [vmem:[%s212 + $0x498] sm:$0xff]
        %v759 = vld [vmem:[%s212 + $0x4a0] sm:$0xff]
        %v760 = vld [vmem:[%s212 + $0x4a8] sm:$0xff]
        %v761 = vld [vmem:[%s212 + $0x4b0] sm:$0xff]
        %v762 = vld [vmem:[%s212 + $0x4b8] sm:$0xff]
        %v763 = vld [vmem:[%s212 + $0x4c0] sm:$0xff]
        %v764 = vld [vmem:[%s212 + $0x4c8] sm:$0xff]
        %v765 = vld [vmem:[%s212 + $0x4d0] sm:$0xff]
        %v766 = vld [vmem:[%s212 + $0x4d8] sm:$0xff]
        %v767 = vld [vmem:[%s212 + $0x4e0] sm:$0xff]
        %v768 = vld [vmem:[%s212 + $0x4e8] sm:$0xff]
        %v769 = vld [vmem:[%s212 + $0x4f0] sm:$0xff]
        %v770 = vld [vmem:[%s212 + $0x4f8] sm:$0xff]
        %v771 = vld [vmem:[%s212 + $0x500] sm:$0xff]
        %v772 = vld [vmem:[%s212 + $0x508] sm:$0xff]
        %v773 = vld [vmem:[%s212 + $0x510] sm:$0xff]
        %v774 = vld [vmem:[%s212 + $0x518] sm:$0xff]
        %v775 = vld [vmem:[%s212 + $0x520] sm:$0xff]
        %v776 = vld [vmem:[%s212 + $0x528] sm:$0xff]
        %v777 = vld [vmem:[%s212 + $0x530] sm:$0xff]
        %v778 = vld [vmem:[%s212 + $0x538] sm:$0xff]
        %v779 = vld [vmem:[%s212 + $0x540] sm:$0xff]
        %v780 = vld [vmem:[%s212 + $0x548] sm:$0xff]
        %v781 = vld [vmem:[%s212 + $0x550] sm:$0xff]
        %v782 = vld [vmem:[%s212 + $0x558] sm:$0xff]
        %v783 = vld [vmem:[%s212 + $0x560] sm:$0xff]
        %v784 = vld [vmem:[%s212 + $0x568] sm:$0xff]
        %v785 = vld [vmem:[%s212 + $0x570] sm:$0xff]
        %v786 = vld [vmem:[%s212 + $0x578] sm:$0xff]
        %v787 = vld [vmem:[%s212 + $0x580] sm:$0xff]
        %v788 = vld [vmem:[%s212 + $0x588] sm:$0xff]
        %v789 = vld [vmem:[%s212 + $0x590] sm:$0xff]
        %v790 = vld [vmem:[%s212 + $0x598] sm:$0xff]
        %v791 = vld [vmem:[%s212 + $0x5a0] sm:$0xff]
        %v792 = vld [vmem:[%s212 + $0x5a8] sm:$0xff]
        %794 = vset.pattern.permute.xlu0 0
        %795 = vperm.xlu0 %794, %v611
        %v796 = vpop.permute.xlu0 %795
        %799 = vset.pattern.permute.xlu0 0
        %800 = vperm.xlu0 %799, %v612
        %v801 = vpop.permute.xlu0 %800
        %804 = vset.pattern.permute.xlu0 0
        %805 = vperm.xlu0 %804, %v613
        %v806 = vpop.permute.xlu0 %805
        %809 = vset.pattern.permute.xlu0 0
        %810 = vperm.xlu0 %809, %v614
        %v811 = vpop.permute.xlu0 %810
        %814 = vset.pattern.permute.xlu0 0
        %815 = vperm.xlu0 %814, %v615
        %v816 = vpop.permute.xlu0 %815
        %819 = vset.pattern.permute.xlu0 0
        %820 = vperm.xlu0 %819, %v616
        %v821 = vpop.permute.xlu0 %820
        %824 = vset.pattern.permute.xlu0 0
        %825 = vperm.xlu0 %824, %v617
        %v826 = vpop.permute.xlu0 %825
        %829 = vset.pattern.permute.xlu0 0
        %830 = vperm.xlu0 %829, %v618
        %v831 = vpop.permute.xlu0 %830
        %834 = vset.pattern.permute.xlu0 0
        %835 = vperm.xlu0 %834, %v619
        %v836 = vpop.permute.xlu0 %835
        %839 = vset.pattern.permute.xlu0 0
        %840 = vperm.xlu0 %839, %v620
        %v841 = vpop.permute.xlu0 %840
        %844 = vset.pattern.permute.xlu0 0
        %845 = vperm.xlu0 %844, %v621
        %v846 = vpop.permute.xlu0 %845
        %849 = vset.pattern.permute.xlu0 0
        %850 = vperm.xlu0 %849, %v622
        %v851 = vpop.permute.xlu0 %850
        %854 = vset.pattern.permute.xlu0 0
        %855 = vperm.xlu0 %854, %v623
        %v856 = vpop.permute.xlu0 %855
        %859 = vset.pattern.permute.xlu0 0
        %860 = vperm.xlu0 %859, %v624
        %v861 = vpop.permute.xlu0 %860
        %864 = vset.pattern.permute.xlu0 0
        %865 = vperm.xlu0 %864, %v625
        %v866 = vpop.permute.xlu0 %865
        %869 = vset.pattern.permute.xlu0 0
        %870 = vperm.xlu0 %869, %v626
        %v871 = vpop.permute.xlu0 %870
        %874 = vset.pattern.permute.xlu0 0
        %875 = vperm.xlu0 %874, %v627
        %v876 = vpop.permute.xlu0 %875
        %879 = vset.pattern.permute.xlu0 0
        %880 = vperm.xlu0 %879, %v628
        %v881 = vpop.permute.xlu0 %880
        %884 = vset.pattern.permute.xlu0 0
        %885 = vperm.xlu0 %884, %v629
        %v886 = vpop.permute.xlu0 %885
        %889 = vset.pattern.permute.xlu0 0
        %890 = vperm.xlu0 %889, %v630
        %v891 = vpop.permute.xlu0 %890
        %894 = vset.pattern.permute.xlu0 0
        %895 = vperm.xlu0 %894, %v631
        %v896 = vpop.permute.xlu0 %895
        %899 = vset.pattern.permute.xlu0 0
        %900 = vperm.xlu0 %899, %v632
        %v901 = vpop.permute.xlu0 %900
        %904 = vset.pattern.permute.xlu0 0
        %905 = vperm.xlu0 %904, %v633
        %v906 = vpop.permute.xlu0 %905
        %909 = vset.pattern.permute.xlu0 0
        %910 = vperm.xlu0 %909, %v634
        %v911 = vpop.permute.xlu0 %910
        %914 = vset.pattern.permute.xlu0 0
        %915 = vperm.xlu0 %914, %v635
        %v916 = vpop.permute.xlu0 %915
        %919 = vset.pattern.permute.xlu0 0
        %920 = vperm.xlu0 %919, %v636
        %v921 = vpop.permute.xlu0 %920
        %924 = vset.pattern.permute.xlu0 0
        %925 = vperm.xlu0 %924, %v637
        %v926 = vpop.permute.xlu0 %925
        %929 = vset.pattern.permute.xlu0 0
        %930 = vperm.xlu0 %929, %v638
        %v931 = vpop.permute.xlu0 %930
        %934 = vset.pattern.permute.xlu0 0
        %935 = vperm.xlu0 %934, %v639
        %v936 = vpop.permute.xlu0 %935
        %939 = vset.pattern.permute.xlu0 0
        %940 = vperm.xlu0 %939, %v640
        %v941 = vpop.permute.xlu0 %940
        %944 = vset.pattern.permute.xlu0 0
        %945 = vperm.xlu0 %944, %v641
        %v946 = vpop.permute.xlu0 %945
        %949 = vset.pattern.permute.xlu0 0
        %950 = vperm.xlu0 %949, %v642
        %v951 = vpop.permute.xlu0 %950
        %954 = vset.pattern.permute.xlu0 0
        %955 = vperm.xlu0 %954, %v643
        %v956 = vpop.permute.xlu0 %955
        %959 = vset.pattern.permute.xlu0 0
        %960 = vperm.xlu0 %959, %v644
        %v961 = vpop.permute.xlu0 %960
        %964 = vset.pattern.permute.xlu0 0
        %965 = vperm.xlu0 %964, %v645
        %v966 = vpop.permute.xlu0 %965
        %969 = vset.pattern.permute.xlu0 0
        %970 = vperm.xlu0 %969, %v646
        %v971 = vpop.permute.xlu0 %970
        %974 = vset.pattern.permute.xlu0 0
        %975 = vperm.xlu0 %974, %v647
        %v976 = vpop.permute.xlu0 %975
        %979 = vset.pattern.permute.xlu0 0
        %980 = vperm.xlu0 %979, %v648
        %v981 = vpop.permute.xlu0 %980
        %984 = vset.pattern.permute.xlu0 0
        %985 = vperm.xlu0 %984, %v649
        %v986 = vpop.permute.xlu0 %985
        %989 = vset.pattern.permute.xlu0 0
        %990 = vperm.xlu0 %989, %v650
        %v991 = vpop.permute.xlu0 %990
        %994 = vset.pattern.permute.xlu0 0
        %995 = vperm.xlu0 %994, %v651
        %v996 = vpop.permute.xlu0 %995
        %999 = vset.pattern.permute.xlu0 0
        %1000 = vperm.xlu0 %999, %v652
        %v1001 = vpop.permute.xlu0 %1000
        %1004 = vset.pattern.permute.xlu0 0
        %1005 = vperm.xlu0 %1004, %v653
        %v1006 = vpop.permute.xlu0 %1005
        %1009 = vset.pattern.permute.xlu0 0
        %1010 = vperm.xlu0 %1009, %v654
        %v1011 = vpop.permute.xlu0 %1010
        %1014 = vset.pattern.permute.xlu0 0
        %1015 = vperm.xlu0 %1014, %v655
        %v1016 = vpop.permute.xlu0 %1015
        %1019 = vset.pattern.permute.xlu0 0
        %1020 = vperm.xlu0 %1019, %v656
        %v1021 = vpop.permute.xlu0 %1020
        %1024 = vset.pattern.permute.xlu0 0
        %1025 = vperm.xlu0 %1024, %v657
        %v1026 = vpop.permute.xlu0 %1025
        %1029 = vset.pattern.permute.xlu0 0
        %1030 = vperm.xlu0 %1029, %v658
        %v1031 = vpop.permute.xlu0 %1030
        %1034 = vset.pattern.permute.xlu0 0
        %1035 = vperm.xlu0 %1034, %v659
        %v1036 = vpop.permute.xlu0 %1035
        %1039 = vset.pattern.permute.xlu0 0
        %1040 = vperm.xlu0 %1039, %v660
        %v1041 = vpop.permute.xlu0 %1040
        %1044 = vset.pattern.permute.xlu0 0
        %1045 = vperm.xlu0 %1044, %v661
        %v1046 = vpop.permute.xlu0 %1045
        %1049 = vset.pattern.permute.xlu0 0
        %1050 = vperm.xlu0 %1049, %v662
        %v1051 = vpop.permute.xlu0 %1050
        %1054 = vset.pattern.permute.xlu0 0
        %1055 = vperm.xlu0 %1054, %v663
        %v1056 = vpop.permute.xlu0 %1055
        %1059 = vset.pattern.permute.xlu0 0
        %1060 = vperm.xlu0 %1059, %v664
        %v1061 = vpop.permute.xlu0 %1060
        %1064 = vset.pattern.permute.xlu0 0
        %1065 = vperm.xlu0 %1064, %v665
        %v1066 = vpop.permute.xlu0 %1065
        %1069 = vset.pattern.permute.xlu0 0
        %1070 = vperm.xlu0 %1069, %v666
        %v1071 = vpop.permute.xlu0 %1070
        %1074 = vset.pattern.permute.xlu0 0
        %1075 = vperm.xlu0 %1074, %v667
        %v1076 = vpop.permute.xlu0 %1075
        %1079 = vset.pattern.permute.xlu0 0
        %1080 = vperm.xlu0 %1079, %v668
        %v1081 = vpop.permute.xlu0 %1080
        %1084 = vset.pattern.permute.xlu0 0
        %1085 = vperm.xlu0 %1084, %v669
        %v1086 = vpop.permute.xlu0 %1085
        %1089 = vset.pattern.permute.xlu0 0
        %1090 = vperm.xlu0 %1089, %v670
        %v1091 = vpop.permute.xlu0 %1090
        %1094 = vset.pattern.permute.xlu0 0
        %1095 = vperm.xlu0 %1094, %v671
        %v1096 = vpop.permute.xlu0 %1095
        %1099 = vset.pattern.permute.xlu0 0
        %1100 = vperm.xlu0 %1099, %v672
        %v1101 = vpop.permute.xlu0 %1100
        %1104 = vset.pattern.permute.xlu0 0
        %1105 = vperm.xlu0 %1104, %v673
        %v1106 = vpop.permute.xlu0 %1105
        %1109 = vset.pattern.permute.xlu0 0
        %1110 = vperm.xlu0 %1109, %v674
        %v1111 = vpop.permute.xlu0 %1110
        %1114 = vset.pattern.permute.xlu0 0
        %1115 = vperm.xlu0 %1114, %v675
        %v1116 = vpop.permute.xlu0 %1115
        %1119 = vset.pattern.permute.xlu0 0
        %1120 = vperm.xlu0 %1119, %v676
        %v1121 = vpop.permute.xlu0 %1120
        %1124 = vset.pattern.permute.xlu0 0
        %1125 = vperm.xlu0 %1124, %v677
        %v1126 = vpop.permute.xlu0 %1125
        %1129 = vset.pattern.permute.xlu0 0
        %1130 = vperm.xlu0 %1129, %v678
        %v1131 = vpop.permute.xlu0 %1130
        %1134 = vset.pattern.permute.xlu0 0
        %1135 = vperm.xlu0 %1134, %v679
        %v1136 = vpop.permute.xlu0 %1135
        %1139 = vset.pattern.permute.xlu0 0
        %1140 = vperm.xlu0 %1139, %v680
        %v1141 = vpop.permute.xlu0 %1140
        %1144 = vset.pattern.permute.xlu0 0
        %1145 = vperm.xlu0 %1144, %v681
        %v1146 = vpop.permute.xlu0 %1145
        %1149 = vset.pattern.permute.xlu0 0
        %1150 = vperm.xlu0 %1149, %v682
        %v1151 = vpop.permute.xlu0 %1150
        %1154 = vset.pattern.permute.xlu0 0
        %1155 = vperm.xlu0 %1154, %v683
        %v1156 = vpop.permute.xlu0 %1155
        %1159 = vset.pattern.permute.xlu0 0
        %1160 = vperm.xlu0 %1159, %v684
        %v1161 = vpop.permute.xlu0 %1160
        %1164 = vset.pattern.permute.xlu0 0
        %1165 = vperm.xlu0 %1164, %v685
        %v1166 = vpop.permute.xlu0 %1165
        %1169 = vset.pattern.permute.xlu0 0
        %1170 = vperm.xlu0 %1169, %v686
        %v1171 = vpop.permute.xlu0 %1170
        %1174 = vset.pattern.permute.xlu0 0
        %1175 = vperm.xlu0 %1174, %v687
        %v1176 = vpop.permute.xlu0 %1175
        %1179 = vset.pattern.permute.xlu0 0
        %1180 = vperm.xlu0 %1179, %v688
        %v1181 = vpop.permute.xlu0 %1180
        %1184 = vset.pattern.permute.xlu0 0
        %1185 = vperm.xlu0 %1184, %v689
        %v1186 = vpop.permute.xlu0 %1185
        %1189 = vset.pattern.permute.xlu0 0
        %1190 = vperm.xlu0 %1189, %v690
        %v1191 = vpop.permute.xlu0 %1190
        %1194 = vset.pattern.permute.xlu0 0
        %1195 = vperm.xlu0 %1194, %v691
        %v1196 = vpop.permute.xlu0 %1195
        %1199 = vset.pattern.permute.xlu0 0
        %1200 = vperm.xlu0 %1199, %v692
        %v1201 = vpop.permute.xlu0 %1200
        %1204 = vset.pattern.permute.xlu0 0
        %1205 = vperm.xlu0 %1204, %v693
        %v1206 = vpop.permute.xlu0 %1205
        %1209 = vset.pattern.permute.xlu0 0
        %1210 = vperm.xlu0 %1209, %v694
        %v1211 = vpop.permute.xlu0 %1210
        %1214 = vset.pattern.permute.xlu0 0
        %1215 = vperm.xlu0 %1214, %v695
        %v1216 = vpop.permute.xlu0 %1215
        %1219 = vset.pattern.permute.xlu0 0
        %1220 = vperm.xlu0 %1219, %v696
        %v1221 = vpop.permute.xlu0 %1220
        %1224 = vset.pattern.permute.xlu0 0
        %1225 = vperm.xlu0 %1224, %v697
        %v1226 = vpop.permute.xlu0 %1225
        %1229 = vset.pattern.permute.xlu0 0
        %1230 = vperm.xlu0 %1229, %v698
        %v1231 = vpop.permute.xlu0 %1230
        %1234 = vset.pattern.permute.xlu0 0
        %1235 = vperm.xlu0 %1234, %v699
        %v1236 = vpop.permute.xlu0 %1235
        %1239 = vset.pattern.permute.xlu0 0
        %1240 = vperm.xlu0 %1239, %v700
        %v1241 = vpop.permute.xlu0 %1240
        %1244 = vset.pattern.permute.xlu0 0
        %1245 = vperm.xlu0 %1244, %v701
        %v1246 = vpop.permute.xlu0 %1245
        %1249 = vset.pattern.permute.xlu0 0
        %1250 = vperm.xlu0 %1249, %v702
        %v1251 = vpop.permute.xlu0 %1250
        %1254 = vset.pattern.permute.xlu0 0
        %1255 = vperm.xlu0 %1254, %v703
        %v1256 = vpop.permute.xlu0 %1255
        %1259 = vset.pattern.permute.xlu0 0
        %1260 = vperm.xlu0 %1259, %v704
        %v1261 = vpop.permute.xlu0 %1260
        %1264 = vset.pattern.permute.xlu0 0
        %1265 = vperm.xlu0 %1264, %v705
        %v1266 = vpop.permute.xlu0 %1265
        %1269 = vset.pattern.permute.xlu0 0
        %1270 = vperm.xlu0 %1269, %v706
        %v1271 = vpop.permute.xlu0 %1270
        %1274 = vset.pattern.permute.xlu0 0
        %1275 = vperm.xlu0 %1274, %v707
        %v1276 = vpop.permute.xlu0 %1275
        %1279 = vset.pattern.permute.xlu0 0
        %1280 = vperm.xlu0 %1279, %v708
        %v1281 = vpop.permute.xlu0 %1280
        %1284 = vset.pattern.permute.xlu0 0
        %1285 = vperm.xlu0 %1284, %v709
        %v1286 = vpop.permute.xlu0 %1285
        %1289 = vset.pattern.permute.xlu0 0
        %1290 = vperm.xlu0 %1289, %v710
        %v1291 = vpop.permute.xlu0 %1290
        %1294 = vset.pattern.permute.xlu0 0
        %1295 = vperm.xlu0 %1294, %v711
        %v1296 = vpop.permute.xlu0 %1295
        %1299 = vset.pattern.permute.xlu0 0
        %1300 = vperm.xlu0 %1299, %v712
        %v1301 = vpop.permute.xlu0 %1300
        %1304 = vset.pattern.permute.xlu0 0
        %1305 = vperm.xlu0 %1304, %v713
        %v1306 = vpop.permute.xlu0 %1305
        %1309 = vset.pattern.permute.xlu0 0
        %1310 = vperm.xlu0 %1309, %v714
        %v1311 = vpop.permute.xlu0 %1310
        %1314 = vset.pattern.permute.xlu0 0
        %1315 = vperm.xlu0 %1314, %v715
        %v1316 = vpop.permute.xlu0 %1315
        %1319 = vset.pattern.permute.xlu0 0
        %1320 = vperm.xlu0 %1319, %v716
        %v1321 = vpop.permute.xlu0 %1320
        %1324 = vset.pattern.permute.xlu0 0
        %1325 = vperm.xlu0 %1324, %v717
        %v1326 = vpop.permute.xlu0 %1325
        %1329 = vset.pattern.permute.xlu0 0
        %1330 = vperm.xlu0 %1329, %v718
        %v1331 = vpop.permute.xlu0 %1330
        %1334 = vset.pattern.permute.xlu0 0
        %1335 = vperm.xlu0 %1334, %v719
        %v1336 = vpop.permute.xlu0 %1335
        %1339 = vset.pattern.permute.xlu0 0
        %1340 = vperm.xlu0 %1339, %v720
        %v1341 = vpop.permute.xlu0 %1340
        %1344 = vset.pattern.permute.xlu0 0
        %1345 = vperm.xlu0 %1344, %v721
        %v1346 = vpop.permute.xlu0 %1345
        %1349 = vset.pattern.permute.xlu0 0
        %1350 = vperm.xlu0 %1349, %v722
        %v1351 = vpop.permute.xlu0 %1350
        %1354 = vset.pattern.permute.xlu0 0
        %1355 = vperm.xlu0 %1354, %v723
        %v1356 = vpop.permute.xlu0 %1355
        %1359 = vset.pattern.permute.xlu0 0
        %1360 = vperm.xlu0 %1359, %v724
        %v1361 = vpop.permute.xlu0 %1360
        %1364 = vset.pattern.permute.xlu0 0
        %1365 = vperm.xlu0 %1364, %v725
        %v1366 = vpop.permute.xlu0 %1365
        %1369 = vset.pattern.permute.xlu0 0
        %1370 = vperm.xlu0 %1369, %v726
        %v1371 = vpop.permute.xlu0 %1370
        %1374 = vset.pattern.permute.xlu0 0
        %1375 = vperm.xlu0 %1374, %v727
        %v1376 = vpop.permute.xlu0 %1375
        %1379 = vset.pattern.permute.xlu0 0
        %1380 = vperm.xlu0 %1379, %v728
        %v1381 = vpop.permute.xlu0 %1380
        %1384 = vset.pattern.permute.xlu0 0
        %1385 = vperm.xlu0 %1384, %v729
        %v1386 = vpop.permute.xlu0 %1385
        %1389 = vset.pattern.permute.xlu0 0
        %1390 = vperm.xlu0 %1389, %v730
        %v1391 = vpop.permute.xlu0 %1390
        %1394 = vset.pattern.permute.xlu0 0
        %1395 = vperm.xlu0 %1394, %v731
        %v1396 = vpop.permute.xlu0 %1395
        %1399 = vset.pattern.permute.xlu0 0
        %1400 = vperm.xlu0 %1399, %v732
        %v1401 = vpop.permute.xlu0 %1400
        %1404 = vset.pattern.permute.xlu0 0
        %1405 = vperm.xlu0 %1404, %v733
        %v1406 = vpop.permute.xlu0 %1405
        %1409 = vset.pattern.permute.xlu0 0
        %1410 = vperm.xlu0 %1409, %v734
        %v1411 = vpop.permute.xlu0 %1410
        %1414 = vset.pattern.permute.xlu0 0
        %1415 = vperm.xlu0 %1414, %v735
        %v1416 = vpop.permute.xlu0 %1415
        %1419 = vset.pattern.permute.xlu0 0
        %1420 = vperm.xlu0 %1419, %v736
        %v1421 = vpop.permute.xlu0 %1420
        %1424 = vset.pattern.permute.xlu0 0
        %1425 = vperm.xlu0 %1424, %v737
        %v1426 = vpop.permute.xlu0 %1425
        %1429 = vset.pattern.permute.xlu0 0
        %1430 = vperm.xlu0 %1429, %v738
        %v1431 = vpop.permute.xlu0 %1430
        %1434 = vset.pattern.permute.xlu0 0
        %1435 = vperm.xlu0 %1434, %v739
        %v1436 = vpop.permute.xlu0 %1435
        %1439 = vset.pattern.permute.xlu0 0
        %1440 = vperm.xlu0 %1439, %v740
        %v1441 = vpop.permute.xlu0 %1440
        %1444 = vset.pattern.permute.xlu0 0
        %1445 = vperm.xlu0 %1444, %v741
        %v1446 = vpop.permute.xlu0 %1445
        %1449 = vset.pattern.permute.xlu0 0
        %1450 = vperm.xlu0 %1449, %v742
        %v1451 = vpop.permute.xlu0 %1450
        %1454 = vset.pattern.permute.xlu0 0
        %1455 = vperm.xlu0 %1454, %v743
        %v1456 = vpop.permute.xlu0 %1455
        %1459 = vset.pattern.permute.xlu0 0
        %1460 = vperm.xlu0 %1459, %v744
        %v1461 = vpop.permute.xlu0 %1460
        %1464 = vset.pattern.permute.xlu0 0
        %1465 = vperm.xlu0 %1464, %v745
        %v1466 = vpop.permute.xlu0 %1465
        %1469 = vset.pattern.permute.xlu0 0
        %1470 = vperm.xlu0 %1469, %v746
        %v1471 = vpop.permute.xlu0 %1470
        %1474 = vset.pattern.permute.xlu0 0
        %1475 = vperm.xlu0 %1474, %v747
        %v1476 = vpop.permute.xlu0 %1475
        %1479 = vset.pattern.permute.xlu0 0
        %1480 = vperm.xlu0 %1479, %v748
        %v1481 = vpop.permute.xlu0 %1480
        %1484 = vset.pattern.permute.xlu0 0
        %1485 = vperm.xlu0 %1484, %v749
        %v1486 = vpop.permute.xlu0 %1485
        %1489 = vset.pattern.permute.xlu0 0
        %1490 = vperm.xlu0 %1489, %v750
        %v1491 = vpop.permute.xlu0 %1490
        %1494 = vset.pattern.permute.xlu0 0
        %1495 = vperm.xlu0 %1494, %v751
        %v1496 = vpop.permute.xlu0 %1495
        %1499 = vset.pattern.permute.xlu0 0
        %1500 = vperm.xlu0 %1499, %v752
        %v1501 = vpop.permute.xlu0 %1500
        %1504 = vset.pattern.permute.xlu0 0
        %1505 = vperm.xlu0 %1504, %v753
        %v1506 = vpop.permute.xlu0 %1505
        %1509 = vset.pattern.permute.xlu0 0
        %1510 = vperm.xlu0 %1509, %v754
        %v1511 = vpop.permute.xlu0 %1510
        %1514 = vset.pattern.permute.xlu0 0
        %1515 = vperm.xlu0 %1514, %v755
        %v1516 = vpop.permute.xlu0 %1515
        %1519 = vset.pattern.permute.xlu0 0
        %1520 = vperm.xlu0 %1519, %v756
        %v1521 = vpop.permute.xlu0 %1520
        %1524 = vset.pattern.permute.xlu0 0
        %1525 = vperm.xlu0 %1524, %v757
        %v1526 = vpop.permute.xlu0 %1525
        %1529 = vset.pattern.permute.xlu0 0
        %1530 = vperm.xlu0 %1529, %v758
        %v1531 = vpop.permute.xlu0 %1530
        %1534 = vset.pattern.permute.xlu0 0
        %1535 = vperm.xlu0 %1534, %v759
        %v1536 = vpop.permute.xlu0 %1535
        %1539 = vset.pattern.permute.xlu0 0
        %1540 = vperm.xlu0 %1539, %v760
        %v1541 = vpop.permute.xlu0 %1540
        %1544 = vset.pattern.permute.xlu0 0
        %1545 = vperm.xlu0 %1544, %v761
        %v1546 = vpop.permute.xlu0 %1545
        %1549 = vset.pattern.permute.xlu0 0
        %1550 = vperm.xlu0 %1549, %v762
        %v1551 = vpop.permute.xlu0 %1550
        %1554 = vset.pattern.permute.xlu0 0
        %1555 = vperm.xlu0 %1554, %v763
        %v1556 = vpop.permute.xlu0 %1555
        %1559 = vset.pattern.permute.xlu0 0
        %1560 = vperm.xlu0 %1559, %v764
        %v1561 = vpop.permute.xlu0 %1560
        %1564 = vset.pattern.permute.xlu0 0
        %1565 = vperm.xlu0 %1564, %v765
        %v1566 = vpop.permute.xlu0 %1565
        %1569 = vset.pattern.permute.xlu0 0
        %1570 = vperm.xlu0 %1569, %v766
        %v1571 = vpop.permute.xlu0 %1570
        %1574 = vset.pattern.permute.xlu0 0
        %1575 = vperm.xlu0 %1574, %v767
        %v1576 = vpop.permute.xlu0 %1575
        %1579 = vset.pattern.permute.xlu0 0
        %1580 = vperm.xlu0 %1579, %v768
        %v1581 = vpop.permute.xlu0 %1580
        %1584 = vset.pattern.permute.xlu0 0
        %1585 = vperm.xlu0 %1584, %v769
        %v1586 = vpop.permute.xlu0 %1585
        %1589 = vset.pattern.permute.xlu0 0
        %1590 = vperm.xlu0 %1589, %v770
        %v1591 = vpop.permute.xlu0 %1590
        %1594 = vset.pattern.permute.xlu0 0
        %1595 = vperm.xlu0 %1594, %v771
        %v1596 = vpop.permute.xlu0 %1595
        %1599 = vset.pattern.permute.xlu0 0
        %1600 = vperm.xlu0 %1599, %v772
        %v1601 = vpop.permute.xlu0 %1600
        %1604 = vset.pattern.permute.xlu0 0
        %1605 = vperm.xlu0 %1604, %v773
        %v1606 = vpop.permute.xlu0 %1605
        %1609 = vset.pattern.permute.xlu0 0
        %1610 = vperm.xlu0 %1609, %v774
        %v1611 = vpop.permute.xlu0 %1610
        %1614 = vset.pattern.permute.xlu0 0
        %1615 = vperm.xlu0 %1614, %v775
        %v1616 = vpop.permute.xlu0 %1615
        %1619 = vset.pattern.permute.xlu0 0
        %1620 = vperm.xlu0 %1619, %v776
        %v1621 = vpop.permute.xlu0 %1620
        %1624 = vset.pattern.permute.xlu0 0
        %1625 = vperm.xlu0 %1624, %v777
        %v1626 = vpop.permute.xlu0 %1625
        %1629 = vset.pattern.permute.xlu0 0
        %1630 = vperm.xlu0 %1629, %v778
        %v1631 = vpop.permute.xlu0 %1630
        %1634 = vset.pattern.permute.xlu0 0
        %1635 = vperm.xlu0 %1634, %v779
        %v1636 = vpop.permute.xlu0 %1635
        %1639 = vset.pattern.permute.xlu0 0
        %1640 = vperm.xlu0 %1639, %v780
        %v1641 = vpop.permute.xlu0 %1640
        %1644 = vset.pattern.permute.xlu0 0
        %1645 = vperm.xlu0 %1644, %v781
        %v1646 = vpop.permute.xlu0 %1645
        %1649 = vset.pattern.permute.xlu0 0
        %1650 = vperm.xlu0 %1649, %v782
        %v1651 = vpop.permute.xlu0 %1650
        %1654 = vset.pattern.permute.xlu0 0
        %1655 = vperm.xlu0 %1654, %v783
        %v1656 = vpop.permute.xlu0 %1655
        %1659 = vset.pattern.permute.xlu0 0
        %1660 = vperm.xlu0 %1659, %v784
        %v1661 = vpop.permute.xlu0 %1660
        %1664 = vset.pattern.permute.xlu0 0
        %1665 = vperm.xlu0 %1664, %v785
        %v1666 = vpop.permute.xlu0 %1665
        %1669 = vset.pattern.permute.xlu0 0
        %1670 = vperm.xlu0 %1669, %v786
        %v1671 = vpop.permute.xlu0 %1670
        %1674 = vset.pattern.permute.xlu0 0
        %1675 = vperm.xlu0 %1674, %v787
        %v1676 = vpop.permute.xlu0 %1675
        %1679 = vset.pattern.permute.xlu0 0
        %1680 = vperm.xlu0 %1679, %v788
        %v1681 = vpop.permute.xlu0 %1680
        %1684 = vset.pattern.permute.xlu0 0
        %1685 = vperm.xlu0 %1684, %v789
        %v1686 = vpop.permute.xlu0 %1685
        %1689 = vset.pattern.permute.xlu0 0
        %1690 = vperm.xlu0 %1689, %v790
        %v1691 = vpop.permute.xlu0 %1690
        %1694 = vset.pattern.permute.xlu0 0
        %1695 = vperm.xlu0 %1694, %v791
        %v1696 = vpop.permute.xlu0 %1695
        %1699 = vset.pattern.permute.xlu0 0
        %1700 = vperm.xlu0 %1699, %v792
        %v1701 = vpop.permute.xlu0 %1700
        %v1703 = vmul.f32 %v247, %v796
        %v1704 = vmul.f32 %v248, %v796
        %v1705 = vmul.f32 %v249, %v801
        %v1706 = vmul.f32 %v250, %v801
        %v1707 = vmul.f32 %v251, %v806
        %v1708 = vmul.f32 %v252, %v806
        %v1709 = vmul.f32 %v253, %v811
        %v1710 = vmul.f32 %v254, %v811
        %v1711 = vmul.f32 %v255, %v816
        %v1712 = vmul.f32 %v256, %v816
        %v1713 = vmul.f32 %v257, %v821
        %v1714 = vmul.f32 %v258, %v821
        %v1715 = vmul.f32 %v259, %v826
        %v1716 = vmul.f32 %v260, %v826
        %v1717 = vmul.f32 %v261, %v831
        %v1718 = vmul.f32 %v262, %v831
        %v1719 = vmul.f32 %v263, %v836
        %v1720 = vmul.f32 %v264, %v836
        %v1721 = vmul.f32 %v265, %v841
        %v1722 = vmul.f32 %v266, %v841
        %v1723 = vmul.f32 %v267, %v846
        %v1724 = vmul.f32 %v268, %v846
        %v1725 = vmul.f32 %v269, %v851
        %v1726 = vmul.f32 %v270, %v851
        %v1727 = vmul.f32 %v271, %v856
        %v1728 = vmul.f32 %v272, %v856
        %v1729 = vmul.f32 %v273, %v861
        %v1730 = vmul.f32 %v274, %v861
        %v1731 = vmul.f32 %v275, %v866
        %v1732 = vmul.f32 %v276, %v866
        %v1733 = vmul.f32 %v277, %v871
        %v1734 = vmul.f32 %v278, %v871
        %v1735 = vmul.f32 %v279, %v876
        %v1736 = vmul.f32 %v280, %v876
        %v1737 = vmul.f32 %v281, %v881
        %v1738 = vmul.f32 %v282, %v881
        %v1739 = vmul.f32 %v283, %v886
        %v1740 = vmul.f32 %v284, %v886
        %v1741 = vmul.f32 %v285, %v891
        %v1742 = vmul.f32 %v286, %v891
        %v1743 = vmul.f32 %v287, %v896
        %v1744 = vmul.f32 %v288, %v896
        %v1745 = vmul.f32 %v289, %v901
        %v1746 = vmul.f32 %v290, %v901
        %v1747 = vmul.f32 %v291, %v906
        %v1748 = vmul.f32 %v292, %v906
        %v1749 = vmul.f32 %v293, %v911
        %v1750 = vmul.f32 %v294, %v911
        %v1751 = vmul.f32 %v295, %v916
        %v1752 = vmul.f32 %v296, %v916
        %v1753 = vmul.f32 %v297, %v921
        %v1754 = vmul.f32 %v298, %v921
        %v1755 = vmul.f32 %v299, %v926
        %v1756 = vmul.f32 %v300, %v926
        %v1757 = vmul.f32 %v301, %v931
        %v1758 = vmul.f32 %v302, %v931
        %v1759 = vmul.f32 %v303, %v936
        %v1760 = vmul.f32 %v304, %v936
        %v1761 = vmul.f32 %v305, %v941
        %v1762 = vmul.f32 %v306, %v941
        %v1763 = vmul.f32 %v307, %v946
        %v1764 = vmul.f32 %v308, %v946
        %v1765 = vmul.f32 %v309, %v951
        %v1766 = vmul.f32 %v310, %v951
        %v1767 = vmul.f32 %v311, %v956
        %v1768 = vmul.f32 %v312, %v956
        %v1769 = vmul.f32 %v313, %v961
        %v1770 = vmul.f32 %v314, %v961
        %v1771 = vmul.f32 %v315, %v966
        %v1772 = vmul.f32 %v316, %v966
        %v1773 = vmul.f32 %v317, %v971
        %v1774 = vmul.f32 %v318, %v971
        %v1775 = vmul.f32 %v319, %v976
        %v1776 = vmul.f32 %v320, %v976
        %v1777 = vmul.f32 %v321, %v981
        %v1778 = vmul.f32 %v322, %v981
        %v1779 = vmul.f32 %v323, %v986
        %v1780 = vmul.f32 %v324, %v986
        %v1781 = vmul.f32 %v325, %v991
        %v1782 = vmul.f32 %v326, %v991
        %v1783 = vmul.f32 %v327, %v996
        %v1784 = vmul.f32 %v328, %v996
        %v1785 = vmul.f32 %v329, %v1001
        %v1786 = vmul.f32 %v330, %v1001
        %v1787 = vmul.f32 %v331, %v1006
        %v1788 = vmul.f32 %v332, %v1006
        %v1789 = vmul.f32 %v333, %v1011
        %v1790 = vmul.f32 %v334, %v1011
        %v1791 = vmul.f32 %v335, %v1016
        %v1792 = vmul.f32 %v336, %v1016
        %v1793 = vmul.f32 %v337, %v1021
        %v1794 = vmul.f32 %v338, %v1021
        %v1795 = vmul.f32 %v339, %v1026
        %v1796 = vmul.f32 %v340, %v1026
        %v1797 = vmul.f32 %v341, %v1031
        %v1798 = vmul.f32 %v342, %v1031
        %v1799 = vmul.f32 %v343, %v1036
        %v1800 = vmul.f32 %v344, %v1036
        %v1801 = vmul.f32 %v345, %v1041
        %v1802 = vmul.f32 %v346, %v1041
        %v1803 = vmul.f32 %v347, %v1046
        %v1804 = vmul.f32 %v348, %v1046
        %v1805 = vmul.f32 %v349, %v1051
        %v1806 = vmul.f32 %v350, %v1051
        %v1807 = vmul.f32 %v351, %v1056
        %v1808 = vmul.f32 %v352, %v1056
        %v1809 = vmul.f32 %v353, %v1061
        %v1810 = vmul.f32 %v354, %v1061
        %v1811 = vmul.f32 %v355, %v1066
        %v1812 = vmul.f32 %v356, %v1066
        %v1813 = vmul.f32 %v357, %v1071
        %v1814 = vmul.f32 %v358, %v1071
        %v1815 = vmul.f32 %v359, %v1076
        %v1816 = vmul.f32 %v360, %v1076
        %v1817 = vmul.f32 %v361, %v1081
        %v1818 = vmul.f32 %v362, %v1081
        %v1819 = vmul.f32 %v363, %v1086
        %v1820 = vmul.f32 %v364, %v1086
        %v1821 = vmul.f32 %v365, %v1091
        %v1822 = vmul.f32 %v366, %v1091
        %v1823 = vmul.f32 %v367, %v1096
        %v1824 = vmul.f32 %v368, %v1096
        %v1825 = vmul.f32 %v369, %v1101
        %v1826 = vmul.f32 %v370, %v1101
        %v1827 = vmul.f32 %v371, %v1106
        %v1828 = vmul.f32 %v372, %v1106
        %v1829 = vmul.f32 %v373, %v1111
        %v1830 = vmul.f32 %v374, %v1111
        %v1831 = vmul.f32 %v375, %v1116
        %v1832 = vmul.f32 %v376, %v1116
        %v1833 = vmul.f32 %v377, %v1121
        %v1834 = vmul.f32 %v378, %v1121
        %v1835 = vmul.f32 %v379, %v1126
        %v1836 = vmul.f32 %v380, %v1126
        %v1837 = vmul.f32 %v381, %v1131
        %v1838 = vmul.f32 %v382, %v1131
        %v1839 = vmul.f32 %v383, %v1136
        %v1840 = vmul.f32 %v384, %v1136
        %v1841 = vmul.f32 %v385, %v1141
        %v1842 = vmul.f32 %v386, %v1141
        %v1843 = vmul.f32 %v387, %v1146
        %v1844 = vmul.f32 %v388, %v1146
        %v1845 = vmul.f32 %v389, %v1151
        %v1846 = vmul.f32 %v390, %v1151
        %v1847 = vmul.f32 %v391, %v1156
        %v1848 = vmul.f32 %v392, %v1156
        %v1849 = vmul.f32 %v393, %v1161
        %v1850 = vmul.f32 %v394, %v1161
        %v1851 = vmul.f32 %v395, %v1166
        %v1852 = vmul.f32 %v396, %v1166
        %v1853 = vmul.f32 %v397, %v1171
        %v1854 = vmul.f32 %v398, %v1171
        %v1855 = vmul.f32 %v399, %v1176
        %v1856 = vmul.f32 %v400, %v1176
        %v1857 = vmul.f32 %v401, %v1181
        %v1858 = vmul.f32 %v402, %v1181
        %v1859 = vmul.f32 %v403, %v1186
        %v1860 = vmul.f32 %v404, %v1186
        %v1861 = vmul.f32 %v405, %v1191
        %v1862 = vmul.f32 %v406, %v1191
        %v1863 = vmul.f32 %v407, %v1196
        %v1864 = vmul.f32 %v408, %v1196
        %v1865 = vmul.f32 %v409, %v1201
        %v1866 = vmul.f32 %v410, %v1201
        %v1867 = vmul.f32 %v411, %v1206
        %v1868 = vmul.f32 %v412, %v1206
        %v1869 = vmul.f32 %v413, %v1211
        %v1870 = vmul.f32 %v414, %v1211
        %v1871 = vmul.f32 %v415, %v1216
        %v1872 = vmul.f32 %v416, %v1216
        %v1873 = vmul.f32 %v417, %v1221
        %v1874 = vmul.f32 %v418, %v1221
        %v1875 = vmul.f32 %v419, %v1226
        %v1876 = vmul.f32 %v420, %v1226
        %v1877 = vmul.f32 %v421, %v1231
        %v1878 = vmul.f32 %v422, %v1231
        %v1879 = vmul.f32 %v423, %v1236
        %v1880 = vmul.f32 %v424, %v1236
        %v1881 = vmul.f32 %v425, %v1241
        %v1882 = vmul.f32 %v426, %v1241
        %v1883 = vmul.f32 %v427, %v1246
        %v1884 = vmul.f32 %v428, %v1246
        %v1885 = vmul.f32 %v429, %v1251
        %v1886 = vmul.f32 %v430, %v1251
        %v1887 = vmul.f32 %v431, %v1256
        %v1888 = vmul.f32 %v432, %v1256
        %v1889 = vmul.f32 %v433, %v1261
        %v1890 = vmul.f32 %v434, %v1261
        %v1891 = vmul.f32 %v435, %v1266
        %v1892 = vmul.f32 %v436, %v1266
        %v1893 = vmul.f32 %v437, %v1271
        %v1894 = vmul.f32 %v438, %v1271
        %v1895 = vmul.f32 %v439, %v1276
        %v1896 = vmul.f32 %v440, %v1276
        %v1897 = vmul.f32 %v441, %v1281
        %v1898 = vmul.f32 %v442, %v1281
        %v1899 = vmul.f32 %v443, %v1286
        %v1900 = vmul.f32 %v444, %v1286
        %v1901 = vmul.f32 %v445, %v1291
        %v1902 = vmul.f32 %v446, %v1291
        %v1903 = vmul.f32 %v447, %v1296
        %v1904 = vmul.f32 %v448, %v1296
        %v1905 = vmul.f32 %v449, %v1301
        %v1906 = vmul.f32 %v450, %v1301
        %v1907 = vmul.f32 %v451, %v1306
        %v1908 = vmul.f32 %v452, %v1306
        %v1909 = vmul.f32 %v453, %v1311
        %v1910 = vmul.f32 %v454, %v1311
        %v1911 = vmul.f32 %v455, %v1316
        %v1912 = vmul.f32 %v456, %v1316
        %v1913 = vmul.f32 %v457, %v1321
        %v1914 = vmul.f32 %v458, %v1321
        %v1915 = vmul.f32 %v459, %v1326
        %v1916 = vmul.f32 %v460, %v1326
        %v1917 = vmul.f32 %v461, %v1331
        %v1918 = vmul.f32 %v462, %v1331
        %v1919 = vmul.f32 %v463, %v1336
        %v1920 = vmul.f32 %v464, %v1336
        %v1921 = vmul.f32 %v465, %v1341
        %v1922 = vmul.f32 %v466, %v1341
        %v1923 = vmul.f32 %v467, %v1346
        %v1924 = vmul.f32 %v468, %v1346
        %v1925 = vmul.f32 %v469, %v1351
        %v1926 = vmul.f32 %v470, %v1351
        %v1927 = vmul.f32 %v471, %v1356
        %v1928 = vmul.f32 %v472, %v1356
        %v1929 = vmul.f32 %v473, %v1361
        %v1930 = vmul.f32 %v474, %v1361
        %v1931 = vmul.f32 %v475, %v1366
        %v1932 = vmul.f32 %v476, %v1366
        %v1933 = vmul.f32 %v477, %v1371
        %v1934 = vmul.f32 %v478, %v1371
        %v1935 = vmul.f32 %v479, %v1376
        %v1936 = vmul.f32 %v480, %v1376
        %v1937 = vmul.f32 %v481, %v1381
        %v1938 = vmul.f32 %v482, %v1381
        %v1939 = vmul.f32 %v483, %v1386
        %v1940 = vmul.f32 %v484, %v1386
        %v1941 = vmul.f32 %v485, %v1391
        %v1942 = vmul.f32 %v486, %v1391
        %v1943 = vmul.f32 %v487, %v1396
        %v1944 = vmul.f32 %v488, %v1396
        %v1945 = vmul.f32 %v489, %v1401
        %v1946 = vmul.f32 %v490, %v1401
        %v1947 = vmul.f32 %v491, %v1406
        %v1948 = vmul.f32 %v492, %v1406
        %v1949 = vmul.f32 %v493, %v1411
        %v1950 = vmul.f32 %v494, %v1411
        %v1951 = vmul.f32 %v495, %v1416
        %v1952 = vmul.f32 %v496, %v1416
        %v1953 = vmul.f32 %v497, %v1421
        %v1954 = vmul.f32 %v498, %v1421
        %v1955 = vmul.f32 %v499, %v1426
        %v1956 = vmul.f32 %v500, %v1426
        %v1957 = vmul.f32 %v501, %v1431
        %v1958 = vmul.f32 %v502, %v1431
        %v1959 = vmul.f32 %v503, %v1436
        %v1960 = vmul.f32 %v504, %v1436
        %v1961 = vmul.f32 %v505, %v1441
        %v1962 = vmul.f32 %v506, %v1441
        %v1963 = vmul.f32 %v507, %v1446
        %v1964 = vmul.f32 %v508, %v1446
        %v1965 = vmul.f32 %v509, %v1451
        %v1966 = vmul.f32 %v510, %v1451
        %v1967 = vmul.f32 %v511, %v1456
        %v1968 = vmul.f32 %v512, %v1456
        %v1969 = vmul.f32 %v513, %v1461
        %v1970 = vmul.f32 %v514, %v1461
        %v1971 = vmul.f32 %v515, %v1466
        %v1972 = vmul.f32 %v516, %v1466
        %v1973 = vmul.f32 %v517, %v1471
        %v1974 = vmul.f32 %v518, %v1471
        %v1975 = vmul.f32 %v519, %v1476
        %v1976 = vmul.f32 %v520, %v1476
        %v1977 = vmul.f32 %v521, %v1481
        %v1978 = vmul.f32 %v522, %v1481
        %v1979 = vmul.f32 %v523, %v1486
        %v1980 = vmul.f32 %v524, %v1486
        %v1981 = vmul.f32 %v525, %v1491
        %v1982 = vmul.f32 %v526, %v1491
        %v1983 = vmul.f32 %v527, %v1496
        %v1984 = vmul.f32 %v528, %v1496
        %v1985 = vmul.f32 %v529, %v1501
        %v1986 = vmul.f32 %v530, %v1501
        %v1987 = vmul.f32 %v531, %v1506
        %v1988 = vmul.f32 %v532, %v1506
        %v1989 = vmul.f32 %v533, %v1511
        %v1990 = vmul.f32 %v534, %v1511
        %v1991 = vmul.f32 %v535, %v1516
        %v1992 = vmul.f32 %v536, %v1516
        %v1993 = vmul.f32 %v537, %v1521
        %v1994 = vmul.f32 %v538, %v1521
        %v1995 = vmul.f32 %v539, %v1526
        %v1996 = vmul.f32 %v540, %v1526
        %v1997 = vmul.f32 %v541, %v1531
        %v1998 = vmul.f32 %v542, %v1531
        %v1999 = vmul.f32 %v543, %v1536
        %v2000 = vmul.f32 %v544, %v1536
        %v2001 = vmul.f32 %v545, %v1541
        %v2002 = vmul.f32 %v546, %v1541
        %v2003 = vmul.f32 %v547, %v1546
        %v2004 = vmul.f32 %v548, %v1546
        %v2005 = vmul.f32 %v549, %v1551
        %v2006 = vmul.f32 %v550, %v1551
        %v2007 = vmul.f32 %v551, %v1556
        %v2008 = vmul.f32 %v552, %v1556
        %v2009 = vmul.f32 %v553, %v1561
        %v2010 = vmul.f32 %v554, %v1561
        %v2011 = vmul.f32 %v555, %v1566
        %v2012 = vmul.f32 %v556, %v1566
        %v2013 = vmul.f32 %v557, %v1571
        %v2014 = vmul.f32 %v558, %v1571
        %v2015 = vmul.f32 %v559, %v1576
        %v2016 = vmul.f32 %v560, %v1576
        %v2017 = vmul.f32 %v561, %v1581
        %v2018 = vmul.f32 %v562, %v1581
        %v2019 = vmul.f32 %v563, %v1586
        %v2020 = vmul.f32 %v564, %v1586
        %v2021 = vmul.f32 %v565, %v1591
        %v2022 = vmul.f32 %v566, %v1591
        %v2023 = vmul.f32 %v567, %v1596
        %v2024 = vmul.f32 %v568, %v1596
        %v2025 = vmul.f32 %v569, %v1601
        %v2026 = vmul.f32 %v570, %v1601
        %v2027 = vmul.f32 %v571, %v1606
        %v2028 = vmul.f32 %v572, %v1606
        %v2029 = vmul.f32 %v573, %v1611
        %v2030 = vmul.f32 %v574, %v1611
        %v2031 = vmul.f32 %v575, %v1616
        %v2032 = vmul.f32 %v576, %v1616
        %v2033 = vmul.f32 %v577, %v1621
        %v2034 = vmul.f32 %v578, %v1621
        %v2035 = vmul.f32 %v579, %v1626
        %v2036 = vmul.f32 %v580, %v1626
        %v2037 = vmul.f32 %v581, %v1631
        %v2038 = vmul.f32 %v582, %v1631
        %v2039 = vmul.f32 %v583, %v1636
        %v2040 = vmul.f32 %v584, %v1636
        %v2041 = vmul.f32 %v585, %v1641
        %v2042 = vmul.f32 %v586, %v1641
        %v2043 = vmul.f32 %v587, %v1646
        %v2044 = vmul.f32 %v588, %v1646
        %v2045 = vmul.f32 %v589, %v1651
        %v2046 = vmul.f32 %v590, %v1651
        %v2047 = vmul.f32 %v591, %v1656
        %v2048 = vmul.f32 %v592, %v1656
        %v2049 = vmul.f32 %v593, %v1661
        %v2050 = vmul.f32 %v594, %v1661
        %v2051 = vmul.f32 %v595, %v1666
        %v2052 = vmul.f32 %v596, %v1666
        %v2053 = vmul.f32 %v597, %v1671
        %v2054 = vmul.f32 %v598, %v1671
        %v2055 = vmul.f32 %v599, %v1676
        %v2056 = vmul.f32 %v600, %v1676
        %v2057 = vmul.f32 %v601, %v1681
        %v2058 = vmul.f32 %v602, %v1681
        %v2059 = vmul.f32 %v603, %v1686
        %v2060 = vmul.f32 %v604, %v1686
        %v2061 = vmul.f32 %v605, %v1691
        %v2062 = vmul.f32 %v606, %v1691
        %v2063 = vmul.f32 %v607, %v1696
        %v2064 = vmul.f32 %v608, %v1696
        %v2065 = vmul.f32 %v609, %v1701
        %v2066 = vmul.f32 %v610, %v1701
        %2067 = vst [vmem:[%s203] sm:$0xff] %v1703
        %vm2068 = vcmask 556032
        %2069 = vst.msk [vmem:[%s203 + $0x8] sm:$0xff] %vm2068, %v1704
        %2070 = vst [vmem:[%s203 + $0x10] sm:$0xff] %v1705
        %2071 = vst.msk [vmem:[%s203 + $0x18] sm:$0xff] %vm2068, %v1706
        %2072 = vst [vmem:[%s203 + $0x20] sm:$0xff] %v1707
        %2073 = vst.msk [vmem:[%s203 + $0x28] sm:$0xff] %vm2068, %v1708
        %2074 = vst [vmem:[%s203 + $0x30] sm:$0xff] %v1709
        %2075 = vst.msk [vmem:[%s203 + $0x38] sm:$0xff] %vm2068, %v1710
        %2076 = vst [vmem:[%s203 + $0x40] sm:$0xff] %v1711
        %2077 = vst.msk [vmem:[%s203 + $0x48] sm:$0xff] %vm2068, %v1712
        %2078 = vst [vmem:[%s203 + $0x50] sm:$0xff] %v1713
        %2079 = vst.msk [vmem:[%s203 + $0x58] sm:$0xff] %vm2068, %v1714
        %2080 = vst [vmem:[%s203 + $0x60] sm:$0xff] %v1715
        %2081 = vst.msk [vmem:[%s203 + $0x68] sm:$0xff] %vm2068, %v1716
        %2082 = vst [vmem:[%s203 + $0x70] sm:$0xff] %v1717
        %2083 = vst.msk [vmem:[%s203 + $0x78] sm:$0xff] %vm2068, %v1718
        %2084 = vst [vmem:[%s203 + $0x80] sm:$0xff] %v1719
        %2085 = vst.msk [vmem:[%s203 + $0x88] sm:$0xff] %vm2068, %v1720
        %2086 = vst [vmem:[%s203 + $0x90] sm:$0xff] %v1721
        %2087 = vst.msk [vmem:[%s203 + $0x98] sm:$0xff] %vm2068, %v1722
        %2088 = vst [vmem:[%s203 + $0xa0] sm:$0xff] %v1723
        %2089 = vst.msk [vmem:[%s203 + $0xa8] sm:$0xff] %vm2068, %v1724
        %2090 = vst [vmem:[%s203 + $0xb0] sm:$0xff] %v1725
        %2091 = vst.msk [vmem:[%s203 + $0xb8] sm:$0xff] %vm2068, %v1726
        %2092 = vst [vmem:[%s203 + $0xc0] sm:$0xff] %v1727
        %2093 = vst.msk [vmem:[%s203 + $0xc8] sm:$0xff] %vm2068, %v1728
        %2094 = vst [vmem:[%s203 + $0xd0] sm:$0xff] %v1729
        %2095 = vst.msk [vmem:[%s203 + $0xd8] sm:$0xff] %vm2068, %v1730
        %2096 = vst [vmem:[%s203 + $0xe0] sm:$0xff] %v1731
        %2097 = vst.msk [vmem:[%s203 + $0xe8] sm:$0xff] %vm2068, %v1732
        %2098 = vst [vmem:[%s203 + $0xf0] sm:$0xff] %v1733
        %2099 = vst.msk [vmem:[%s203 + $0xf8] sm:$0xff] %vm2068, %v1734
        %2100 = vst [vmem:[%s203 + $0x100] sm:$0xff] %v1735
        %2101 = vst.msk [vmem:[%s203 + $0x108] sm:$0xff] %vm2068, %v1736
        %2102 = vst [vmem:[%s203 + $0x110] sm:$0xff] %v1737
        %2103 = vst.msk [vmem:[%s203 + $0x118] sm:$0xff] %vm2068, %v1738
        %2104 = vst [vmem:[%s203 + $0x120] sm:$0xff] %v1739
        %2105 = vst.msk [vmem:[%s203 + $0x128] sm:$0xff] %vm2068, %v1740
        %2106 = vst [vmem:[%s203 + $0x130] sm:$0xff] %v1741
        %2107 = vst.msk [vmem:[%s203 + $0x138] sm:$0xff] %vm2068, %v1742
        %2108 = vst [vmem:[%s203 + $0x140] sm:$0xff] %v1743
        %2109 = vst.msk [vmem:[%s203 + $0x148] sm:$0xff] %vm2068, %v1744
        %2110 = vst [vmem:[%s203 + $0x150] sm:$0xff] %v1745
        %2111 = vst.msk [vmem:[%s203 + $0x158] sm:$0xff] %vm2068, %v1746
        %2112 = vst [vmem:[%s203 + $0x160] sm:$0xff] %v1747
        %2113 = vst.msk [vmem:[%s203 + $0x168] sm:$0xff] %vm2068, %v1748
        %2114 = vst [vmem:[%s203 + $0x170] sm:$0xff] %v1749
        %2115 = vst.msk [vmem:[%s203 + $0x178] sm:$0xff] %vm2068, %v1750
        %2116 = vst [vmem:[%s203 + $0x180] sm:$0xff] %v1751
        %2117 = vst.msk [vmem:[%s203 + $0x188] sm:$0xff] %vm2068, %v1752
        %2118 = vst [vmem:[%s203 + $0x190] sm:$0xff] %v1753
        %2119 = vst.msk [vmem:[%s203 + $0x198] sm:$0xff] %vm2068, %v1754
        %2120 = vst [vmem:[%s203 + $0x1a0] sm:$0xff] %v1755
        %2121 = vst.msk [vmem:[%s203 + $0x1a8] sm:$0xff] %vm2068, %v1756
        %2122 = vst [vmem:[%s203 + $0x1b0] sm:$0xff] %v1757
        %2123 = vst.msk [vmem:[%s203 + $0x1b8] sm:$0xff] %vm2068, %v1758
        %2124 = vst [vmem:[%s203 + $0x1c0] sm:$0xff] %v1759
        %2125 = vst.msk [vmem:[%s203 + $0x1c8] sm:$0xff] %vm2068, %v1760
        %2126 = vst [vmem:[%s203 + $0x1d0] sm:$0xff] %v1761
        %2127 = vst.msk [vmem:[%s203 + $0x1d8] sm:$0xff] %vm2068, %v1762
        %2128 = vst [vmem:[%s203 + $0x1e0] sm:$0xff] %v1763
        %2129 = vst.msk [vmem:[%s203 + $0x1e8] sm:$0xff] %vm2068, %v1764
        %2130 = vst [vmem:[%s203 + $0x1f0] sm:$0xff] %v1765
        %2131 = vst.msk [vmem:[%s203 + $0x1f8] sm:$0xff] %vm2068, %v1766
        %2132 = vst [vmem:[%s203 + $0x200] sm:$0xff] %v1767
        %2133 = vst.msk [vmem:[%s203 + $0x208] sm:$0xff] %vm2068, %v1768
        %2134 = vst [vmem:[%s203 + $0x210] sm:$0xff] %v1769
        %2135 = vst.msk [vmem:[%s203 + $0x218] sm:$0xff] %vm2068, %v1770
        %2136 = vst [vmem:[%s203 + $0x220] sm:$0xff] %v1771
        %2137 = vst.msk [vmem:[%s203 + $0x228] sm:$0xff] %vm2068, %v1772
        %2138 = vst [vmem:[%s203 + $0x230] sm:$0xff] %v1773
        %2139 = vst.msk [vmem:[%s203 + $0x238] sm:$0xff] %vm2068, %v1774
        %2140 = vst [vmem:[%s203 + $0x240] sm:$0xff] %v1775
        %2141 = vst.msk [vmem:[%s203 + $0x248] sm:$0xff] %vm2068, %v1776
        %2142 = vst [vmem:[%s203 + $0x250] sm:$0xff] %v1777
        %2143 = vst.msk [vmem:[%s203 + $0x258] sm:$0xff] %vm2068, %v1778
        %2144 = vst [vmem:[%s203 + $0x260] sm:$0xff] %v1779
        %2145 = vst.msk [vmem:[%s203 + $0x268] sm:$0xff] %vm2068, %v1780
        %2146 = vst [vmem:[%s203 + $0x270] sm:$0xff] %v1781
        %2147 = vst.msk [vmem:[%s203 + $0x278] sm:$0xff] %vm2068, %v1782
        %2148 = vst [vmem:[%s203 + $0x280] sm:$0xff] %v1783
        %2149 = vst.msk [vmem:[%s203 + $0x288] sm:$0xff] %vm2068, %v1784
        %2150 = vst [vmem:[%s203 + $0x290] sm:$0xff] %v1785
        %2151 = vst.msk [vmem:[%s203 + $0x298] sm:$0xff] %vm2068, %v1786
        %2152 = vst [vmem:[%s203 + $0x2a0] sm:$0xff] %v1787
        %2153 = vst.msk [vmem:[%s203 + $0x2a8] sm:$0xff] %vm2068, %v1788
        %2154 = vst [vmem:[%s203 + $0x2b0] sm:$0xff] %v1789
        %2155 = vst.msk [vmem:[%s203 + $0x2b8] sm:$0xff] %vm2068, %v1790
        %2156 = vst [vmem:[%s203 + $0x2c0] sm:$0xff] %v1791
        %2157 = vst.msk [vmem:[%s203 + $0x2c8] sm:$0xff] %vm2068, %v1792
        %2158 = vst [vmem:[%s203 + $0x2d0] sm:$0xff] %v1793
        %2159 = vst.msk [vmem:[%s203 + $0x2d8] sm:$0xff] %vm2068, %v1794
        %2160 = vst [vmem:[%s203 + $0x2e0] sm:$0xff] %v1795
        %2161 = vst.msk [vmem:[%s203 + $0x2e8] sm:$0xff] %vm2068, %v1796
        %2162 = vst [vmem:[%s203 + $0x2f0] sm:$0xff] %v1797
        %2163 = vst.msk [vmem:[%s203 + $0x2f8] sm:$0xff] %vm2068, %v1798
        %2164 = vst [vmem:[%s203 + $0x300] sm:$0xff] %v1799
        %2165 = vst.msk [vmem:[%s203 + $0x308] sm:$0xff] %vm2068, %v1800
        %2166 = vst [vmem:[%s203 + $0x310] sm:$0xff] %v1801
        %2167 = vst.msk [vmem:[%s203 + $0x318] sm:$0xff] %vm2068, %v1802
        %2168 = vst [vmem:[%s203 + $0x320] sm:$0xff] %v1803
        %2169 = vst.msk [vmem:[%s203 + $0x328] sm:$0xff] %vm2068, %v1804
        %2170 = vst [vmem:[%s203 + $0x330] sm:$0xff] %v1805
        %2171 = vst.msk [vmem:[%s203 + $0x338] sm:$0xff] %vm2068, %v1806
        %2172 = vst [vmem:[%s203 + $0x340] sm:$0xff] %v1807
        %2173 = vst.msk [vmem:[%s203 + $0x348] sm:$0xff] %vm2068, %v1808
        %2174 = vst [vmem:[%s203 + $0x350] sm:$0xff] %v1809
        %2175 = vst.msk [vmem:[%s203 + $0x358] sm:$0xff] %vm2068, %v1810
        %2176 = vst [vmem:[%s203 + $0x360] sm:$0xff] %v1811
        %2177 = vst.msk [vmem:[%s203 + $0x368] sm:$0xff] %vm2068, %v1812
        %2178 = vst [vmem:[%s203 + $0x370] sm:$0xff] %v1813
        %2179 = vst.msk [vmem:[%s203 + $0x378] sm:$0xff] %vm2068, %v1814
        %2180 = vst [vmem:[%s203 + $0x380] sm:$0xff] %v1815
        %2181 = vst.msk [vmem:[%s203 + $0x388] sm:$0xff] %vm2068, %v1816
        %2182 = vst [vmem:[%s203 + $0x390] sm:$0xff] %v1817
        %2183 = vst.msk [vmem:[%s203 + $0x398] sm:$0xff] %vm2068, %v1818
        %2184 = vst [vmem:[%s203 + $0x3a0] sm:$0xff] %v1819
        %2185 = vst.msk [vmem:[%s203 + $0x3a8] sm:$0xff] %vm2068, %v1820
        %2186 = vst [vmem:[%s203 + $0x3b0] sm:$0xff] %v1821
        %2187 = vst.msk [vmem:[%s203 + $0x3b8] sm:$0xff] %vm2068, %v1822
        %2188 = vst [vmem:[%s203 + $0x3c0] sm:$0xff] %v1823
        %2189 = vst.msk [vmem:[%s203 + $0x3c8] sm:$0xff] %vm2068, %v1824
        %2190 = vst [vmem:[%s203 + $0x3d0] sm:$0xff] %v1825
        %2191 = vst.msk [vmem:[%s203 + $0x3d8] sm:$0xff] %vm2068, %v1826
        %2192 = vst [vmem:[%s203 + $0x3e0] sm:$0xff] %v1827
        %2193 = vst.msk [vmem:[%s203 + $0x3e8] sm:$0xff] %vm2068, %v1828
        %2194 = vst [vmem:[%s203 + $0x3f0] sm:$0xff] %v1829
        %2195 = vst.msk [vmem:[%s203 + $0x3f8] sm:$0xff] %vm2068, %v1830
        %2196 = vst [vmem:[%s203 + $0x400] sm:$0xff] %v1831
        %2197 = vst.msk [vmem:[%s203 + $0x408] sm:$0xff] %vm2068, %v1832
        %2198 = vst [vmem:[%s203 + $0x410] sm:$0xff] %v1833
        %2199 = vst.msk [vmem:[%s203 + $0x418] sm:$0xff] %vm2068, %v1834
        %2200 = vst [vmem:[%s203 + $0x420] sm:$0xff] %v1835
        %2201 = vst.msk [vmem:[%s203 + $0x428] sm:$0xff] %vm2068, %v1836
        %2202 = vst [vmem:[%s203 + $0x430] sm:$0xff] %v1837
        %2203 = vst.msk [vmem:[%s203 + $0x438] sm:$0xff] %vm2068, %v1838
        %2204 = vst [vmem:[%s203 + $0x440] sm:$0xff] %v1839
        %2205 = vst.msk [vmem:[%s203 + $0x448] sm:$0xff] %vm2068, %v1840
        %2206 = vst [vmem:[%s203 + $0x450] sm:$0xff] %v1841
        %2207 = vst.msk [vmem:[%s203 + $0x458] sm:$0xff] %vm2068, %v1842
        %2208 = vst [vmem:[%s203 + $0x460] sm:$0xff] %v1843
        %2209 = vst.msk [vmem:[%s203 + $0x468] sm:$0xff] %vm2068, %v1844
        %2210 = vst [vmem:[%s203 + $0x470] sm:$0xff] %v1845
        %2211 = vst.msk [vmem:[%s203 + $0x478] sm:$0xff] %vm2068, %v1846
        %2212 = vst [vmem:[%s203 + $0x480] sm:$0xff] %v1847
        %2213 = vst.msk [vmem:[%s203 + $0x488] sm:$0xff] %vm2068, %v1848
        %2214 = vst [vmem:[%s203 + $0x490] sm:$0xff] %v1849
        %2215 = vst.msk [vmem:[%s203 + $0x498] sm:$0xff] %vm2068, %v1850
        %2216 = vst [vmem:[%s203 + $0x4a0] sm:$0xff] %v1851
        %2217 = vst.msk [vmem:[%s203 + $0x4a8] sm:$0xff] %vm2068, %v1852
        %2218 = vst [vmem:[%s203 + $0x4b0] sm:$0xff] %v1853
        %2219 = vst.msk [vmem:[%s203 + $0x4b8] sm:$0xff] %vm2068, %v1854
        %2220 = vst [vmem:[%s203 + $0x4c0] sm:$0xff] %v1855
        %2221 = vst.msk [vmem:[%s203 + $0x4c8] sm:$0xff] %vm2068, %v1856
        %2222 = vst [vmem:[%s203 + $0x4d0] sm:$0xff] %v1857
        %2223 = vst.msk [vmem:[%s203 + $0x4d8] sm:$0xff] %vm2068, %v1858
        %2224 = vst [vmem:[%s203 + $0x4e0] sm:$0xff] %v1859
        %2225 = vst.msk [vmem:[%s203 + $0x4e8] sm:$0xff] %vm2068, %v1860
        %2226 = vst [vmem:[%s203 + $0x4f0] sm:$0xff] %v1861
        %2227 = vst.msk [vmem:[%s203 + $0x4f8] sm:$0xff] %vm2068, %v1862
        %2228 = vst [vmem:[%s203 + $0x500] sm:$0xff] %v1863
        %2229 = vst.msk [vmem:[%s203 + $0x508] sm:$0xff] %vm2068, %v1864
        %2230 = vst [vmem:[%s203 + $0x510] sm:$0xff] %v1865
        %2231 = vst.msk [vmem:[%s203 + $0x518] sm:$0xff] %vm2068, %v1866
        %2232 = vst [vmem:[%s203 + $0x520] sm:$0xff] %v1867
        %2233 = vst.msk [vmem:[%s203 + $0x528] sm:$0xff] %vm2068, %v1868
        %2234 = vst [vmem:[%s203 + $0x530] sm:$0xff] %v1869
        %2235 = vst.msk [vmem:[%s203 + $0x538] sm:$0xff] %vm2068, %v1870
        %2236 = vst [vmem:[%s203 + $0x540] sm:$0xff] %v1871
        %2237 = vst.msk [vmem:[%s203 + $0x548] sm:$0xff] %vm2068, %v1872
        %2238 = vst [vmem:[%s203 + $0x550] sm:$0xff] %v1873
        %2239 = vst.msk [vmem:[%s203 + $0x558] sm:$0xff] %vm2068, %v1874
        %2240 = vst [vmem:[%s203 + $0x560] sm:$0xff] %v1875
        %2241 = vst.msk [vmem:[%s203 + $0x568] sm:$0xff] %vm2068, %v1876
        %2242 = vst [vmem:[%s203 + $0x570] sm:$0xff] %v1877
        %2243 = vst.msk [vmem:[%s203 + $0x578] sm:$0xff] %vm2068, %v1878
        %2244 = vst [vmem:[%s203 + $0x580] sm:$0xff] %v1879
        %2245 = vst.msk [vmem:[%s203 + $0x588] sm:$0xff] %vm2068, %v1880
        %2246 = vst [vmem:[%s203 + $0x590] sm:$0xff] %v1881
        %2247 = vst.msk [vmem:[%s203 + $0x598] sm:$0xff] %vm2068, %v1882
        %2248 = vst [vmem:[%s203 + $0x5a0] sm:$0xff] %v1883
        %2249 = vst.msk [vmem:[%s203 + $0x5a8] sm:$0xff] %vm2068, %v1884
        %2250 = vst [vmem:[%s203 + $0x5b0] sm:$0xff] %v1885
        %2251 = vst.msk [vmem:[%s203 + $0x5b8] sm:$0xff] %vm2068, %v1886
        %2252 = vst [vmem:[%s203 + $0x5c0] sm:$0xff] %v1887
        %2253 = vst.msk [vmem:[%s203 + $0x5c8] sm:$0xff] %vm2068, %v1888
        %2254 = vst [vmem:[%s203 + $0x5d0] sm:$0xff] %v1889
        %2255 = vst.msk [vmem:[%s203 + $0x5d8] sm:$0xff] %vm2068, %v1890
        %2256 = vst [vmem:[%s203 + $0x5e0] sm:$0xff] %v1891
        %2257 = vst.msk [vmem:[%s203 + $0x5e8] sm:$0xff] %vm2068, %v1892
        %2258 = vst [vmem:[%s203 + $0x5f0] sm:$0xff] %v1893
        %2259 = vst.msk [vmem:[%s203 + $0x5f8] sm:$0xff] %vm2068, %v1894
        %2260 = vst [vmem:[%s203 + $0x600] sm:$0xff] %v1895
        %2261 = vst.msk [vmem:[%s203 + $0x608] sm:$0xff] %vm2068, %v1896
        %2262 = vst [vmem:[%s203 + $0x610] sm:$0xff] %v1897
        %2263 = vst.msk [vmem:[%s203 + $0x618] sm:$0xff] %vm2068, %v1898
        %2264 = vst [vmem:[%s203 + $0x620] sm:$0xff] %v1899
        %2265 = vst.msk [vmem:[%s203 + $0x628] sm:$0xff] %vm2068, %v1900
        %2266 = vst [vmem:[%s203 + $0x630] sm:$0xff] %v1901
        %2267 = vst.msk [vmem:[%s203 + $0x638] sm:$0xff] %vm2068, %v1902
        %2268 = vst [vmem:[%s203 + $0x640] sm:$0xff] %v1903
        %2269 = vst.msk [vmem:[%s203 + $0x648] sm:$0xff] %vm2068, %v1904
        %2270 = vst [vmem:[%s203 + $0x650] sm:$0xff] %v1905
        %2271 = vst.msk [vmem:[%s203 + $0x658] sm:$0xff] %vm2068, %v1906
        %2272 = vst [vmem:[%s203 + $0x660] sm:$0xff] %v1907
        %2273 = vst.msk [vmem:[%s203 + $0x668] sm:$0xff] %vm2068, %v1908
        %2274 = vst [vmem:[%s203 + $0x670] sm:$0xff] %v1909
        %2275 = vst.msk [vmem:[%s203 + $0x678] sm:$0xff] %vm2068, %v1910
        %2276 = vst [vmem:[%s203 + $0x680] sm:$0xff] %v1911
        %2277 = vst.msk [vmem:[%s203 + $0x688] sm:$0xff] %vm2068, %v1912
        %2278 = vst [vmem:[%s203 + $0x690] sm:$0xff] %v1913
        %2279 = vst.msk [vmem:[%s203 + $0x698] sm:$0xff] %vm2068, %v1914
        %2280 = vst [vmem:[%s203 + $0x6a0] sm:$0xff] %v1915
        %2281 = vst.msk [vmem:[%s203 + $0x6a8] sm:$0xff] %vm2068, %v1916
        %2282 = vst [vmem:[%s203 + $0x6b0] sm:$0xff] %v1917
        %2283 = vst.msk [vmem:[%s203 + $0x6b8] sm:$0xff] %vm2068, %v1918
        %2284 = vst [vmem:[%s203 + $0x6c0] sm:$0xff] %v1919
        %2285 = vst.msk [vmem:[%s203 + $0x6c8] sm:$0xff] %vm2068, %v1920
        %2286 = vst [vmem:[%s203 + $0x6d0] sm:$0xff] %v1921
        %2287 = vst.msk [vmem:[%s203 + $0x6d8] sm:$0xff] %vm2068, %v1922
        %2288 = vst [vmem:[%s203 + $0x6e0] sm:$0xff] %v1923
        %2289 = vst.msk [vmem:[%s203 + $0x6e8] sm:$0xff] %vm2068, %v1924
        %2290 = vst [vmem:[%s203 + $0x6f0] sm:$0xff] %v1925
        %2291 = vst.msk [vmem:[%s203 + $0x6f8] sm:$0xff] %vm2068, %v1926
        %2292 = vst [vmem:[%s203 + $0x700] sm:$0xff] %v1927
        %2293 = vst.msk [vmem:[%s203 + $0x708] sm:$0xff] %vm2068, %v1928
        %2294 = vst [vmem:[%s203 + $0x710] sm:$0xff] %v1929
        %2295 = vst.msk [vmem:[%s203 + $0x718] sm:$0xff] %vm2068, %v1930
        %2296 = vst [vmem:[%s203 + $0x720] sm:$0xff] %v1931
        %2297 = vst.msk [vmem:[%s203 + $0x728] sm:$0xff] %vm2068, %v1932
        %2298 = vst [vmem:[%s203 + $0x730] sm:$0xff] %v1933
        %2299 = vst.msk [vmem:[%s203 + $0x738] sm:$0xff] %vm2068, %v1934
        %2300 = vst [vmem:[%s203 + $0x740] sm:$0xff] %v1935
        %2301 = vst.msk [vmem:[%s203 + $0x748] sm:$0xff] %vm2068, %v1936
        %2302 = vst [vmem:[%s203 + $0x750] sm:$0xff] %v1937
        %2303 = vst.msk [vmem:[%s203 + $0x758] sm:$0xff] %vm2068, %v1938
        %2304 = vst [vmem:[%s203 + $0x760] sm:$0xff] %v1939
        %2305 = vst.msk [vmem:[%s203 + $0x768] sm:$0xff] %vm2068, %v1940
        %2306 = vst [vmem:[%s203 + $0x770] sm:$0xff] %v1941
        %2307 = vst.msk [vmem:[%s203 + $0x778] sm:$0xff] %vm2068, %v1942
        %2308 = vst [vmem:[%s203 + $0x780] sm:$0xff] %v1943
        %2309 = vst.msk [vmem:[%s203 + $0x788] sm:$0xff] %vm2068, %v1944
        %2310 = vst [vmem:[%s203 + $0x790] sm:$0xff] %v1945
        %2311 = vst.msk [vmem:[%s203 + $0x798] sm:$0xff] %vm2068, %v1946
        %2312 = vst [vmem:[%s203 + $0x7a0] sm:$0xff] %v1947
        %2313 = vst.msk [vmem:[%s203 + $0x7a8] sm:$0xff] %vm2068, %v1948
        %2314 = vst [vmem:[%s203 + $0x7b0] sm:$0xff] %v1949
        %2315 = vst.msk [vmem:[%s203 + $0x7b8] sm:$0xff] %vm2068, %v1950
        %2316 = vst [vmem:[%s203 + $0x7c0] sm:$0xff] %v1951
        %2317 = vst.msk [vmem:[%s203 + $0x7c8] sm:$0xff] %vm2068, %v1952
        %2318 = vst [vmem:[%s203 + $0x7d0] sm:$0xff] %v1953
        %2319 = vst.msk [vmem:[%s203 + $0x7d8] sm:$0xff] %vm2068, %v1954
        %2320 = vst [vmem:[%s203 + $0x7e0] sm:$0xff] %v1955
        %2321 = vst.msk [vmem:[%s203 + $0x7e8] sm:$0xff] %vm2068, %v1956
        %2322 = vst [vmem:[%s203 + $0x7f0] sm:$0xff] %v1957
        %2323 = vst.msk [vmem:[%s203 + $0x7f8] sm:$0xff] %vm2068, %v1958
        %2324 = vst [vmem:[%s203 + $0x800] sm:$0xff] %v1959
        %2325 = vst.msk [vmem:[%s203 + $0x808] sm:$0xff] %vm2068, %v1960
        %2326 = vst [vmem:[%s203 + $0x810] sm:$0xff] %v1961
        %2327 = vst.msk [vmem:[%s203 + $0x818] sm:$0xff] %vm2068, %v1962
        %2328 = vst [vmem:[%s203 + $0x820] sm:$0xff] %v1963
        %2329 = vst.msk [vmem:[%s203 + $0x828] sm:$0xff] %vm2068, %v1964
        %2330 = vst [vmem:[%s203 + $0x830] sm:$0xff] %v1965
        %2331 = vst.msk [vmem:[%s203 + $0x838] sm:$0xff] %vm2068, %v1966
        %2332 = vst [vmem:[%s203 + $0x840] sm:$0xff] %v1967
        %2333 = vst.msk [vmem:[%s203 + $0x848] sm:$0xff] %vm2068, %v1968
        %2334 = vst [vmem:[%s203 + $0x850] sm:$0xff] %v1969
        %2335 = vst.msk [vmem:[%s203 + $0x858] sm:$0xff] %vm2068, %v1970
        %2336 = vst [vmem:[%s203 + $0x860] sm:$0xff] %v1971
        %2337 = vst.msk [vmem:[%s203 + $0x868] sm:$0xff] %vm2068, %v1972
        %2338 = vst [vmem:[%s203 + $0x870] sm:$0xff] %v1973
        %2339 = vst.msk [vmem:[%s203 + $0x878] sm:$0xff] %vm2068, %v1974
        %2340 = vst [vmem:[%s203 + $0x880] sm:$0xff] %v1975
        %2341 = vst.msk [vmem:[%s203 + $0x888] sm:$0xff] %vm2068, %v1976
        %2342 = vst [vmem:[%s203 + $0x890] sm:$0xff] %v1977
        %2343 = vst.msk [vmem:[%s203 + $0x898] sm:$0xff] %vm2068, %v1978
        %2344 = vst [vmem:[%s203 + $0x8a0] sm:$0xff] %v1979
        %2345 = vst.msk [vmem:[%s203 + $0x8a8] sm:$0xff] %vm2068, %v1980
        %2346 = vst [vmem:[%s203 + $0x8b0] sm:$0xff] %v1981
        %2347 = vst.msk [vmem:[%s203 + $0x8b8] sm:$0xff] %vm2068, %v1982
        %2348 = vst [vmem:[%s203 + $0x8c0] sm:$0xff] %v1983
        %2349 = vst.msk [vmem:[%s203 + $0x8c8] sm:$0xff] %vm2068, %v1984
        %2350 = vst [vmem:[%s203 + $0x8d0] sm:$0xff] %v1985
        %2351 = vst.msk [vmem:[%s203 + $0x8d8] sm:$0xff] %vm2068, %v1986
        %2352 = vst [vmem:[%s203 + $0x8e0] sm:$0xff] %v1987
        %2353 = vst.msk [vmem:[%s203 + $0x8e8] sm:$0xff] %vm2068, %v1988
        %2354 = vst [vmem:[%s203 + $0x8f0] sm:$0xff] %v1989
        %2355 = vst.msk [vmem:[%s203 + $0x8f8] sm:$0xff] %vm2068, %v1990
        %2356 = vst [vmem:[%s203 + $0x900] sm:$0xff] %v1991
        %2357 = vst.msk [vmem:[%s203 + $0x908] sm:$0xff] %vm2068, %v1992
        %2358 = vst [vmem:[%s203 + $0x910] sm:$0xff] %v1993
        %2359 = vst.msk [vmem:[%s203 + $0x918] sm:$0xff] %vm2068, %v1994
        %2360 = vst [vmem:[%s203 + $0x920] sm:$0xff] %v1995
        %2361 = vst.msk [vmem:[%s203 + $0x928] sm:$0xff] %vm2068, %v1996
        %2362 = vst [vmem:[%s203 + $0x930] sm:$0xff] %v1997
        %2363 = vst.msk [vmem:[%s203 + $0x938] sm:$0xff] %vm2068, %v1998
        %2364 = vst [vmem:[%s203 + $0x940] sm:$0xff] %v1999
        %2365 = vst.msk [vmem:[%s203 + $0x948] sm:$0xff] %vm2068, %v2000
        %2366 = vst [vmem:[%s203 + $0x950] sm:$0xff] %v2001
        %2367 = vst.msk [vmem:[%s203 + $0x958] sm:$0xff] %vm2068, %v2002
        %2368 = vst [vmem:[%s203 + $0x960] sm:$0xff] %v2003
        %2369 = vst.msk [vmem:[%s203 + $0x968] sm:$0xff] %vm2068, %v2004
        %2370 = vst [vmem:[%s203 + $0x970] sm:$0xff] %v2005
        %2371 = vst.msk [vmem:[%s203 + $0x978] sm:$0xff] %vm2068, %v2006
        %2372 = vst [vmem:[%s203 + $0x980] sm:$0xff] %v2007
        %2373 = vst.msk [vmem:[%s203 + $0x988] sm:$0xff] %vm2068, %v2008
        %2374 = vst [vmem:[%s203 + $0x990] sm:$0xff] %v2009
        %2375 = vst.msk [vmem:[%s203 + $0x998] sm:$0xff] %vm2068, %v2010
        %2376 = vst [vmem:[%s203 + $0x9a0] sm:$0xff] %v2011
        %2377 = vst.msk [vmem:[%s203 + $0x9a8] sm:$0xff] %vm2068, %v2012
        %2378 = vst [vmem:[%s203 + $0x9b0] sm:$0xff] %v2013
        %2379 = vst.msk [vmem:[%s203 + $0x9b8] sm:$0xff] %vm2068, %v2014
        %2380 = vst [vmem:[%s203 + $0x9c0] sm:$0xff] %v2015
        %2381 = vst.msk [vmem:[%s203 + $0x9c8] sm:$0xff] %vm2068, %v2016
        %2382 = vst [vmem:[%s203 + $0x9d0] sm:$0xff] %v2017
        %2383 = vst.msk [vmem:[%s203 + $0x9d8] sm:$0xff] %vm2068, %v2018
        %2384 = vst [vmem:[%s203 + $0x9e0] sm:$0xff] %v2019
        %2385 = vst.msk [vmem:[%s203 + $0x9e8] sm:$0xff] %vm2068, %v2020
        %2386 = vst [vmem:[%s203 + $0x9f0] sm:$0xff] %v2021
        %2387 = vst.msk [vmem:[%s203 + $0x9f8] sm:$0xff] %vm2068, %v2022
        %2388 = vst [vmem:[%s203 + $0xa00] sm:$0xff] %v2023
        %2389 = vst.msk [vmem:[%s203 + $0xa08] sm:$0xff] %vm2068, %v2024
        %2390 = vst [vmem:[%s203 + $0xa10] sm:$0xff] %v2025
        %2391 = vst.msk [vmem:[%s203 + $0xa18] sm:$0xff] %vm2068, %v2026
        %2392 = vst [vmem:[%s203 + $0xa20] sm:$0xff] %v2027
        %2393 = vst.msk [vmem:[%s203 + $0xa28] sm:$0xff] %vm2068, %v2028
        %2394 = vst [vmem:[%s203 + $0xa30] sm:$0xff] %v2029
        %2395 = vst.msk [vmem:[%s203 + $0xa38] sm:$0xff] %vm2068, %v2030
        %2396 = vst [vmem:[%s203 + $0xa40] sm:$0xff] %v2031
        %2397 = vst.msk [vmem:[%s203 + $0xa48] sm:$0xff] %vm2068, %v2032
        %2398 = vst [vmem:[%s203 + $0xa50] sm:$0xff] %v2033
        %2399 = vst.msk [vmem:[%s203 + $0xa58] sm:$0xff] %vm2068, %v2034
        %2400 = vst [vmem:[%s203 + $0xa60] sm:$0xff] %v2035
        %2401 = vst.msk [vmem:[%s203 + $0xa68] sm:$0xff] %vm2068, %v2036
        %2402 = vst [vmem:[%s203 + $0xa70] sm:$0xff] %v2037
        %2403 = vst.msk [vmem:[%s203 + $0xa78] sm:$0xff] %vm2068, %v2038
        %2404 = vst [vmem:[%s203 + $0xa80] sm:$0xff] %v2039
        %2405 = vst.msk [vmem:[%s203 + $0xa88] sm:$0xff] %vm2068, %v2040
        %2406 = vst [vmem:[%s203 + $0xa90] sm:$0xff] %v2041
        %2407 = vst.msk [vmem:[%s203 + $0xa98] sm:$0xff] %vm2068, %v2042
        %2408 = vst [vmem:[%s203 + $0xaa0] sm:$0xff] %v2043
        %2409 = vst.msk [vmem:[%s203 + $0xaa8] sm:$0xff] %vm2068, %v2044
        %2410 = vst [vmem:[%s203 + $0xab0] sm:$0xff] %v2045
        %2411 = vst.msk [vmem:[%s203 + $0xab8] sm:$0xff] %vm2068, %v2046
        %2412 = vst [vmem:[%s203 + $0xac0] sm:$0xff] %v2047
        %2413 = vst.msk [vmem:[%s203 + $0xac8] sm:$0xff] %vm2068, %v2048
        %2414 = vst [vmem:[%s203 + $0xad0] sm:$0xff] %v2049
        %2415 = vst.msk [vmem:[%s203 + $0xad8] sm:$0xff] %vm2068, %v2050
        %2416 = vst [vmem:[%s203 + $0xae0] sm:$0xff] %v2051
        %2417 = vst.msk [vmem:[%s203 + $0xae8] sm:$0xff] %vm2068, %v2052
        %2418 = vst [vmem:[%s203 + $0xaf0] sm:$0xff] %v2053
        %2419 = vst.msk [vmem:[%s203 + $0xaf8] sm:$0xff] %vm2068, %v2054
        %2420 = vst [vmem:[%s203 + $0xb00] sm:$0xff] %v2055
        %2421 = vst.msk [vmem:[%s203 + $0xb08] sm:$0xff] %vm2068, %v2056
        %2422 = vst [vmem:[%s203 + $0xb10] sm:$0xff] %v2057
        %2423 = vst.msk [vmem:[%s203 + $0xb18] sm:$0xff] %vm2068, %v2058
        %2424 = vst [vmem:[%s203 + $0xb20] sm:$0xff] %v2059
        %2425 = vst.msk [vmem:[%s203 + $0xb28] sm:$0xff] %vm2068, %v2060
        %2426 = vst [vmem:[%s203 + $0xb30] sm:$0xff] %v2061
        %2427 = vst.msk [vmem:[%s203 + $0xb38] sm:$0xff] %vm2068, %v2062
        %2428 = vst [vmem:[%s203 + $0xb40] sm:$0xff] %v2063
        %2429 = vst.msk [vmem:[%s203 + $0xb48] sm:$0xff] %vm2068, %v2064
        %2430 = vst [vmem:[%s203 + $0xb50] sm:$0xff] %v2065
        %2431 = vst.msk [vmem:[%s203 + $0xb58] sm:$0xff] %vm2068, %v2066
        %s2432 = sand.u32 %s89, 1
        %s2433 = sand.u32 %s89, 1
        %s2434 = smul.addr %s2433, 2912
        %s2435 = scalar_lea.vmem [#allocation2], %s2434
        // Predicated region
        $region29: #{channel_scale_mul.1} parent=27 // pred_check
          %p2436 = pneg %p99
        $region30: #{channel_scale_mul.1} parent=27 // pred_check_branch
          %2438 = sbr.rel (%p2436) target = $region32
        $region31: #{channel_scale_mul.1} parent=27 // pred_region
          %s2439 = smul.u32 182, %s17
          %s2440 = smul.u32 2, %s18
          %s2441 = ssub.s32 363, %s2439
          %p2442 = scmp.lt.s32.totalorder %s2441, 182
          %s2443 = scalar_select %p2442, %s2441, 182
          %s2444 = smul.u32 8, %s2443
          %s2445 = smul.u32 %s2444, 2
          %p2446 = scmp.ne.s32.totalorder 0, %s2445
          %s2447 = smul.addr %s2439, 2
          %s2448 = sadd.s32 %s2440, %s2447
          %s2449 = smul.addr %s2448, 8
          %s2450 = scalar_lea.vmem %s2, %s2449
          // Predicated region
          $region33: #{channel_scale_mul.1} parent=31 // pred_check
            %p2451 = pneg %p2446
          $region34: #{channel_scale_mul.1} parent=31 // pred_check_branch
            %2453 = sbr.rel (%p2451) target = $region36
          $region35: #{channel_scale_mul.1} parent=31 // pred_region
            // Predicated region
            $region37: #{channel_scale_mul.1} parent=35 // pred_check
              _
            $region38: #{channel_scale_mul.1} parent=35 // pred_check_branch
              %2455 = sbr.rel (0) target = $region40
            $region39: #{channel_scale_mul.1} parent=35 // pred_region
              %s2456 = sshrl.u32 %s2443, 4
              // While loop
              $region41: #{channel_scale_mul.1} parent=39 // loop_pre_header
                _
              $region42: #{channel_scale_mul.1} parent=39 // loop_header
                %s2458 = sphi 0, %s2460
                %p2459 = scmp.ge.s32.totalorder %s2458, %s2456
                %s2463 = sphi 0, %s2532
                %s2464 = sphi %s2435, %s2535
                %s2465 = sphi %s2450, %s2536
              $region43: #{channel_scale_mul.1} parent=39 // loop_header_branch
                %2462 = sbr.rel (%p2459) target = $region47
              $region44: #{channel_scale_mul.1} parent=39 // loop_body
                %v2466 = vld [vmem:[%s2464] sm:$0xff]
                %2467 = vst [vmem:[%s2465] sm:$0xff] %v2466
                %v2468 = vld [vmem:[%s2464 + $0x10] sm:$0xff]
                %2469 = vst [vmem:[%s2465 + $0x10] sm:$0xff] %v2468
                %v2470 = vld [vmem:[%s2464 + $0x20] sm:$0xff]
                %2471 = vst [vmem:[%s2465 + $0x20] sm:$0xff] %v2470
                %v2472 = vld [vmem:[%s2464 + $0x30] sm:$0xff]
                %2473 = vst [vmem:[%s2465 + $0x30] sm:$0xff] %v2472
                %v2474 = vld [vmem:[%s2464 + $0x40] sm:$0xff]
                %2475 = vst [vmem:[%s2465 + $0x40] sm:$0xff] %v2474
                %v2476 = vld [vmem:[%s2464 + $0x50] sm:$0xff]
                %2477 = vst [vmem:[%s2465 + $0x50] sm:$0xff] %v2476
                %v2478 = vld [vmem:[%s2464 + $0x60] sm:$0xff]
                %2479 = vst [vmem:[%s2465 + $0x60] sm:$0xff] %v2478
                %v2480 = vld [vmem:[%s2464 + $0x70] sm:$0xff]
                %2481 = vst [vmem:[%s2465 + $0x70] sm:$0xff] %v2480
                %v2482 = vld [vmem:[%s2464 + $0x80] sm:$0xff]
                %2483 = vst [vmem:[%s2465 + $0x80] sm:$0xff] %v2482
                %v2484 = vld [vmem:[%s2464 + $0x90] sm:$0xff]
                %2485 = vst [vmem:[%s2465 + $0x90] sm:$0xff] %v2484
                %v2486 = vld [vmem:[%s2464 + $0xa0] sm:$0xff]
                %2487 = vst [vmem:[%s2465 + $0xa0] sm:$0xff] %v2486
                %v2488 = vld [vmem:[%s2464 + $0xb0] sm:$0xff]
                %2489 = vst [vmem:[%s2465 + $0xb0] sm:$0xff] %v2488
                %v2490 = vld [vmem:[%s2464 + $0xc0] sm:$0xff]
                %2491 = vst [vmem:[%s2465 + $0xc0] sm:$0xff] %v2490
                %v2492 = vld [vmem:[%s2464 + $0xd0] sm:$0xff]
                %2493 = vst [vmem:[%s2465 + $0xd0] sm:$0xff] %v2492
                %v2494 = vld [vmem:[%s2464 + $0xe0] sm:$0xff]
                %2495 = vst [vmem:[%s2465 + $0xe0] sm:$0xff] %v2494
                %v2496 = vld [vmem:[%s2464 + $0xf0] sm:$0xff]
                %2497 = vst [vmem:[%s2465 + $0xf0] sm:$0xff] %v2496
                %v2498 = vld [vmem:[%s2464 + $0x8] sm:$0xff]
                %2499 = vst [vmem:[%s2465 + $0x8] sm:$0xff] %v2498
                %v2500 = vld [vmem:[%s2464 + $0x18] sm:$0xff]
                %2501 = vst [vmem:[%s2465 + $0x18] sm:$0xff] %v2500
                %v2502 = vld [vmem:[%s2464 + $0x28] sm:$0xff]
                %2503 = vst [vmem:[%s2465 + $0x28] sm:$0xff] %v2502
                %v2504 = vld [vmem:[%s2464 + $0x38] sm:$0xff]
                %2505 = vst [vmem:[%s2465 + $0x38] sm:$0xff] %v2504
                %v2506 = vld [vmem:[%s2464 + $0x48] sm:$0xff]
                %2507 = vst [vmem:[%s2465 + $0x48] sm:$0xff] %v2506
                %v2508 = vld [vmem:[%s2464 + $0x58] sm:$0xff]
                %2509 = vst [vmem:[%s2465 + $0x58] sm:$0xff] %v2508
                %v2510 = vld [vmem:[%s2464 + $0x68] sm:$0xff]
                %2511 = vst [vmem:[%s2465 + $0x68] sm:$0xff] %v2510
                %v2512 = vld [vmem:[%s2464 + $0x78] sm:$0xff]
                %2513 = vst [vmem:[%s2465 + $0x78] sm:$0xff] %v2512
                %v2514 = vld [vmem:[%s2464 + $0x88] sm:$0xff]
                %2515 = vst [vmem:[%s2465 + $0x88] sm:$0xff] %v2514
                %v2516 = vld [vmem:[%s2464 + $0x98] sm:$0xff]
                %2517 = vst [vmem:[%s2465 + $0x98] sm:$0xff] %v2516
                %v2518 = vld [vmem:[%s2464 + $0xa8] sm:$0xff]
                %2519 = vst [vmem:[%s2465 + $0xa8] sm:$0xff] %v2518
                %v2520 = vld [vmem:[%s2464 + $0xb8] sm:$0xff]
                %2521 = vst [vmem:[%s2465 + $0xb8] sm:$0xff] %v2520
                %v2522 = vld [vmem:[%s2464 + $0xc8] sm:$0xff]
                %2523 = vst [vmem:[%s2465 + $0xc8] sm:$0xff] %v2522
                %v2524 = vld [vmem:[%s2464 + $0xd8] sm:$0xff]
                %2525 = vst [vmem:[%s2465 + $0xd8] sm:$0xff] %v2524
                %v2526 = vld [vmem:[%s2464 + $0xe8] sm:$0xff]
                %2527 = vst [vmem:[%s2465 + $0xe8] sm:$0xff] %v2526
                %v2528 = vld [vmem:[%s2464 + $0xf8] sm:$0xff]
                %2529 = vst [vmem:[%s2465 + $0xf8] sm:$0xff] %v2528
                %s2530 = sadd.s32 1, %s2463
                %p2531 = scmp.ge.s32.totalorder %s2530, %s2456
                %s2532 = scalar_select %p2531, 0, %s2530
                %s2533 = smul.u32 %s2532, 256
                %s2534 = smul.u32 %s2532, 256
                %s2535 = scalar_lea.vmem %s2435, %s2533 [#allocation2]
                %s2536 = scalar_lea.vmem %s2450, %s2534
              $region45: #{channel_scale_mul.1} parent=39 // loop_footer
                %s2460 = sadd.s32 %s2458, 1
              $region46: #{channel_scale_mul.1} parent=39 // loop_footer_branch
                %2457 = sbr.rel target = $region42
              $region47: #{channel_scale_mul.1} parent=39 // loop_exit
                _
              %s2537 = sshrl.u32 %s2443, 4
              %s2538 = sand.u32 %s2443, 15
              %s2539 = smul.u32 %s2537, 16
              %s2540 = smul.u32 16, %s2539
              %s2541 = scalar_lea.vmem %s2435, %s2540 [#allocation2]
              %s2542 = smul.u32 16, %s2539
              %s2543 = scalar_lea.vmem %s2450, %s2542
              // While loop
              $region48: #{channel_scale_mul.1} parent=39 // loop_pre_header
                _
              $region49: #{channel_scale_mul.1} parent=39 // loop_header
                %s2545 = sphi 0, %s2547
                %p2546 = scmp.ge.s32.totalorder %s2545, %s2538
                %s2550 = sphi 0, %s2559
                %s2551 = sphi %s2541, %s2562
                %s2552 = sphi %s2543, %s2563
              $region50: #{channel_scale_mul.1} parent=39 // loop_header_branch
                %2549 = sbr.rel (%p2546) target = $region54
              $region51: #{channel_scale_mul.1} parent=39 // loop_body
                %v2553 = vld [vmem:[%s2551] sm:$0xff]
                %2554 = vst [vmem:[%s2552] sm:$0xff] %v2553
                %v2555 = vld [vmem:[%s2551 + $0x8] sm:$0xff]
                %2556 = vst [vmem:[%s2552 + $0x8] sm:$0xff] %v2555
                %s2557 = sadd.s32 1, %s2550
                %p2558 = scmp.ge.s32.totalorder %s2557, %s2538
                %s2559 = scalar_select %p2558, 0, %s2557
                %s2560 = smul.u32 %s2559, 16
                %s2561 = smul.u32 %s2559, 16
                %s2562 = scalar_lea.vmem %s2541, %s2560 [#allocation2]
                %s2563 = scalar_lea.vmem %s2543, %s2561
              $region52: #{channel_scale_mul.1} parent=39 // loop_footer
                %s2547 = sadd.s32 %s2545, 1
              $region53: #{channel_scale_mul.1} parent=39 // loop_footer_branch
                %2544 = sbr.rel target = $region49
              $region54: #{channel_scale_mul.1} parent=39 // loop_exit
                _
            $region40: #{channel_scale_mul.1} parent=35 // pred_fallthru
              _
            // Predicated region
            $region55: #{channel_scale_mul.1} parent=35 // pred_check
              _
            $region56: #{channel_scale_mul.1} parent=35 // pred_check_branch
              %2565 = sbr.rel target = $region58
            $region57: #{channel_scale_mul.1} parent=35 // pred_region
              _
            $region58: #{channel_scale_mul.1} parent=35 // pred_fallthru
              _
          $region36: #{channel_scale_mul.1} parent=31 // pred_fallthru
            _
          %2566 = vnop
        $region32: #{channel_scale_mul.1} parent=27 // pred_fallthru
          _
      $region28: #{channel_scale_mul.1} parent=5 // pred_fallthru
        _
      %p2567 = scmp.le.s32.totalorder 2, %s8
      // Predicated region
      $region59: #{channel_scale_mul.1} parent=5 // pred_check
        %p2568 = pneg %p2567
      $region60: #{channel_scale_mul.1} parent=5 // pred_check_branch
        %2570 = sbr.rel (%p2568) target = $region62
      $region61: #{channel_scale_mul.1} parent=5 // pred_region
        %s2571 = ssub.s32 %s8, 2
        // Predicated region
        $region63: #{channel_scale_mul.1} parent=61 // pred_check
          %p2572 = pneg %p105
        $region64: #{channel_scale_mul.1} parent=61 // pred_check_branch
          %2574 = sbr.rel (%p2572) target = $region66
        $region65: #{channel_scale_mul.1} parent=61 // pred_region
          %s2575 = sand.u32 %s90, 1
          %s2576 = sand.u32 %s90, 1
          %s2577 = smul.addr %s2576, 2912
          %s2578 = scalar_lea.vmem [#allocation2], %s2577
        $region66: #{channel_scale_mul.1} parent=61 // pred_fallthru
          _
      $region62: #{channel_scale_mul.1} parent=5 // pred_fallthru
        _
    $region6: #{channel_scale_mul.1} parent=1 // loop_footer
      %s12 = sadd.s32 1, %s8
    $region7: #{channel_scale_mul.1} parent=1 // loop_footer_branch
      %7 = sbr.rel target = $region3
    $region8: #{channel_scale_mul.1} parent=1 // loop_exit
      _

</llo_original>
